<compile_context>
chip_gen: v6e
topology: v6e:2x2x1
jax: 0.10.0
libtpu: 0.0.40
codegen_flags: <defaults>
</compile_context>

<pallas_src>
import numpy as np
import jax
import jax.numpy as jnp
from jax import lax
from jax.experimental import pallas as pl
from jax.experimental.pallas import tpu as pltpu


# ---------------------------- static geometry -------------------------------
HW1, HW2, HW3 = 16, 8, 4                      # square feature-map sizes per stage
WP1, WP2, WP3 = HW1 + 2, HW2 + 2, HW3 + 2     # padded row widths: 18, 10, 6
P1 = 384                                      # lane-padded flat length, stage 1 (>= 18*18)
P2 = 128                                      # lane-padded flat length, stages 2/3
CIN1 = 8                                      # stage-1 input channels, zero-padded 3 -> 8

# packed-constant layout: one (64, 507) f32 array
_W3_OFF, _W2_OFF, _W1_OFF = 0, 288, 432       # W3: 64x288, W2: 32x144, W1: 16x72
_B1_COL, _B2_COL, _B3_COL = 504, 505, 506
_WPACK_COLS = 507


# --------------------------- fused Pallas kernel ----------------------------

def _fused_cnn_kernel(x_ref, w_ref, aux_ref, o_ref):
    f32 = jnp.float32

    # ---- unpack the packed constants (static slices of the VMEM block) ----
    W3 = w_ref[0:64, _W3_OFF:_W3_OFF + 288]        # (64, 288)  (Cout, 9*Cin)
    W2 = w_ref[0:32, _W2_OFF:_W2_OFF + 144]        # (32, 144)
    W1 = w_ref[0:16, _W1_OFF:_W1_OFF + 72]         # (16, 72)   (Cin padded to 8)
    b1 = w_ref[0:16, _B1_COL:_B1_COL + 1]          # (16, 1)
    b2 = w_ref[0:32, _B2_COL:_B2_COL + 1]          # (32, 1)
    b3 = w_ref[0:64, _B3_COL:_B3_COL + 1]          # (64, 1)
    tgt1 = aux_ref[0:1, :]                         # (1,128) pool-1 gather targets (-1 = none)
    tgt2 = aux_ref[1:2, :]                         # (1,128) pool-2 gather targets
    gmask = aux_ref[2:3, :].astype(f32)            # (1,128) valid-lane mask for stage-3 output

    # 0/1 pooling select matrices generated on-chip: T[k, m] = 1 iff k == tgt[m].
    # (They decimate by 2 and re-insert the zero padding ring; -1 targets -> all-zero column.)
    T1 = (lax.broadcasted_iota(jnp.int32, (P1, 128), 0) == tgt1).astype(f32)   # (384, 128)
    T2 = (lax.broadcasted_iota(jnp.int32, (P2, 128), 0) == tgt2).astype(f32)   # (128, 128)

    def conv3x3_relu(x, w, b, wp, p):
        # x: (Cin, p) flat zero-padded image.  One K = 9*Cin MXU dot.
        taps = []
        for dy in range(3):
            for dx in range(3):
                off = dy * wp + dx
                taps.append(x if off == 0 else pltpu.roll(x, p - off, axis=1))
        patches = jnp.concatenate(taps, axis=0)                    # (9*Cin, p)
        y = jnp.dot(w, patches, preferred_element_type=f32) + b    # (Cout, p)
        return jnp.maximum(y, 0.0)

    def maxpool2x2(a, t, wp, p):
        v = jnp.maximum(a, pltpu.roll(a, p - wp, axis=1))          # vertical pair max
        h = jnp.maximum(v, pltpu.roll(v, p - 1, axis=1))           # horizontal pair max
        # stride-2 decimation + re-padding for the next stage (one-hot select matmul)
        return jnp.dot(h, t, preferred_element_type=f32)           # (C, 128)

    feats = []
    for img in range(x_ref.shape[0]):              # static unroll over the batch
        x1 = x_ref[img]                            # (8, 384)
        a1 = conv3x3_relu(x1, W1, b1, WP1, P1)     # (16, 384)
        f2 = maxpool2x2(a1, T1, WP1, P1)           # (16, 128)
        a2 = conv3x3_relu(f2, W2, b2, WP2, P2)     # (32, 128)
        f3 = maxpool2x2(a2, T2, WP2, P2)           # (32, 128)
        a3 = conv3x3_relu(f3, W3, b3, WP3, P2)     # (64, 128)
        # fused global average pool over the 16 valid pixels
        feats.append(jnp.sum(a3 * gmask, axis=1, keepdims=True) * (1.0 / float(HW3 * HW3)))

    o_ref[...] = jnp.concatenate(feats, axis=1)    # (64, B)


# --------------------------- host-side constants -----------------------------

def _build_aux():
    aux = np.full((3, 128), -1, dtype=np.int32)
    # pool-1: source lane (in the 18-wide stage-1 flat grid) feeding each lane of
    # the 10-wide padded stage-2 flat grid
    for yo in range(HW2):
        for xo in range(HW2):
            aux[0, (yo + 1) * WP2 + (xo + 1)] = 2 * yo * WP1 + 2 * xo
    # pool-2: 10-wide stage-2 grid -> 6-wide padded stage-3 grid
    for yo in range(HW3):
        for xo in range(HW3):
            aux[1, (yo + 1) * WP3 + (xo + 1)] = 2 * yo * WP2 + 2 * xo
    # valid-lane mask of the stage-3 conv output (4x4 pixels in the 6-wide flat grid)
    aux[2, :] = 0
    for y in range(HW3):
        for x in range(HW3):
            aux[2, y * WP3 + x] = 1
    return aux


_AUX = _build_aux()


def _pack_constants(params):
    w1, b1, w2, b2, w3, b3 = params                       # HWIO conv weights
    w1p = jnp.pad(w1, ((0, 0), (0, 0), (0, CIN1 - 3), (0, 0)))   # pad Cin 3 -> 8
    pk = jnp.zeros((64, _WPACK_COLS), jnp.float32)
    pk = pk.at[:64, _W3_OFF:_W3_OFF + 288].set(w3.reshape(9 * 32, 64).T)
    pk = pk.at[:32, _W2_OFF:_W2_OFF + 144].set(w2.reshape(9 * 16, 32).T)
    pk = pk.at[:16, _W1_OFF:_W1_OFF + 72].set(w1p.reshape(9 * CIN1, 16).T)
    pk = pk.at[:16, _B1_COL].set(b1)
    pk = pk.at[:32, _B2_COL].set(b2)
    pk = pk.at[:64, _B3_COL].set(b3)
    return pk


# --------------------------------- wrapper ----------------------------------

@jax.jit
def cnn_encoder_forward(x_nchw, params):
    B = x_nchw.shape[0]

    # NCHW, spatially zero-padded, flattened + channel-padded: this IS the
    # channels-on-sublane / spatial-on-lane layout the kernel wants (no transpose).
    xp = jnp.pad(x_nchw, ((0, 0), (0, 0), (1, 1), (1, 1)))            # (B, 3, 18, 18)
    xflat = xp.reshape(B, 3, WP1 * WP1)                               # (B, 3, 324)
    xflat = jnp.pad(xflat, ((0, 0), (0, CIN1 - 3), (0, P1 - WP1 * WP1)))  # (B, 8, 384)

    wpack = _pack_constants(params)                                   # (64, 507) f32
    aux = jnp.asarray(_AUX)                                           # (3, 128) i32

    out = pl.pallas_call(
        _fused_cnn_kernel,
        out_shape=jax.ShapeDtypeStruct((64, B), jnp.float32),
        grid=(1,),
        in_specs=[
            pl.BlockSpec((B, CIN1, P1), lambda i: (0, 0, 0)),
            pl.BlockSpec((64, _WPACK_COLS), lambda i: (0, 0)),
            pl.BlockSpec((3, 128), lambda i: (0, 0)),
        ],
        out_specs=pl.BlockSpec((64, B), lambda i: (0, 0)),
        compiler_params=pltpu.CompilerParams(
            dimension_semantics=("arbitrary",),
        ),
    )(xflat, wpack, aux)
    return out.T                                                      # (B, 64)


# ----------------------------- params / reference ---------------------------

def init_params(key):
    ks = jax.random.split(key, 6)

    def conv_init(kw, kb, cin, cout):
        fan_in = cin * 9
        w = jax.random.normal(kw, (3, 3, cin, cout), jnp.float32) / jnp.sqrt(fan_in)
        b = jax.random.normal(kb, (cout,), jnp.float32) * 0.01
        return w, b

    w1, b1 = conv_init(ks[0], ks[1], 3, 16)
    w2, b2 = conv_init(ks[2], ks[3], 16, 32)
    w3, b3 = conv_init(ks[4], ks[5], 32, 64)
    return (w1, b1, w2, b2, w3, b3)


def reference_forward(x_nchw, params):
    w1, b1, w2, b2, w3, b3 = params
    x = jnp.transpose(x_nchw, (0, 2, 3, 1))

    def conv(x, w, b):
        y = lax.conv_general_dilated(x, w, (1, 1), 'SAME',
                                     dimension_numbers=('NHWC', 'HWIO', 'NHWC'))
        return jnp.maximum(y + b, 0.0)

    def pool(x):
        return lax.reduce_window(x, -jnp.inf, lax.max, (1, 2, 2, 1), (1, 2, 2, 1), 'VALID')

    x = pool(conv(x, w1, b1))
    x = pool(conv(x, w2, b2))
    x = conv(x, w3, b3)
    return jnp.mean(x, axis=(1, 2))


if __name__ == "__main__":
    key = jax.random.PRNGKey(0)
    kx, kp = jax.random.split(key)
    x = jax.random.normal(kx, (2, 3, 16, 16), jnp.float32)   # NCHW like PyTorch
    params = init_params(kp)

    out = jax.block_until_ready(cnn_encoder_forward(x, params))
    assert out.shape == (2, 64), out.shape

    ref = jax.block_until_ready(reference_forward(x, params))
    assert jnp.allclose(out, ref, atol=1e-4, rtol=1e-4), float(jnp.max(jnp.abs(out - ref)))

    print("KERNEL_OK")
</pallas_src>

<mosaic_0001>
module attributes {stable_mosaic.version = 11 : i64} {
  func.func @_fused_cnn_kernel(%arg0: i32, %arg1: memref<2x8x384xf32, #tpu.memory_space<vmem>>, %arg2: memref<64x507xf32, #tpu.memory_space<vmem>>, %arg3: memref<3x128xi32, #tpu.memory_space<vmem>>, %arg4: memref<64x2xf32, #tpu.memory_space<vmem>>) attributes {dimension_semantics = [#tpu.dimension_semantics<arbitrary>], iteration_bounds = array<i64: 1>, scalar_prefetch = 0 : i64, scratch_operands = 0 : i64, tpu.core_type = #tpu.core_type<tc>, window_params = [{pipeline_mode = #tpu.pipeline_mode<synchronous>, transform_indices = @transform_0, window_bounds = array<i64: 2, 8, 384>}, {pipeline_mode = #tpu.pipeline_mode<synchronous>, transform_indices = @transform_1, window_bounds = array<i64: 64, 507>}, {pipeline_mode = #tpu.pipeline_mode<synchronous>, transform_indices = @transform_2, window_bounds = array<i64: 3, 128>}, {pipeline_mode = #tpu.pipeline_mode<synchronous>, transform_indices = @transform_3, window_bounds = array<i64: 64, 2>}]} {
    %c0 = arith.constant 0 : index
    %c0_0 = arith.constant 0 : index
    %0 = vector.load %arg2[%c0, %c0_0] : memref<64x507xf32, #tpu.memory_space<vmem>>, vector<64x288xf32>
    %c0_1 = arith.constant 0 : index
    %c288 = arith.constant 288 : index
    %1 = vector.load %arg2[%c0_1, %c288] : memref<64x507xf32, #tpu.memory_space<vmem>>, vector<32x144xf32>
    %c0_2 = arith.constant 0 : index
    %c432 = arith.constant 432 : index
    %2 = vector.load %arg2[%c0_2, %c432] : memref<64x507xf32, #tpu.memory_space<vmem>>, vector<16x72xf32>
    %c0_3 = arith.constant 0 : index
    %c504 = arith.constant 504 : index
    %3 = vector.load %arg2[%c0_3, %c504] : memref<64x507xf32, #tpu.memory_space<vmem>>, vector<16x1xf32>
    %c0_4 = arith.constant 0 : index
    %c505 = arith.constant 505 : index
    %4 = vector.load %arg2[%c0_4, %c505] : memref<64x507xf32, #tpu.memory_space<vmem>>, vector<32x1xf32>
    %c0_5 = arith.constant 0 : index
    %c506 = arith.constant 506 : index
    %5 = vector.load %arg2[%c0_5, %c506] : memref<64x507xf32, #tpu.memory_space<vmem>>, vector<64x1xf32>
    %c0_6 = arith.constant 0 : index
    %c0_7 = arith.constant 0 : index
    %6 = vector.load %arg3[%c0_6, %c0_7] : memref<3x128xi32, #tpu.memory_space<vmem>>, vector<1x128xi32>
    %c1 = arith.constant 1 : index
    %c0_8 = arith.constant 0 : index
    %7 = vector.load %arg3[%c1, %c0_8] : memref<3x128xi32, #tpu.memory_space<vmem>>, vector<1x128xi32>
    %c2 = arith.constant 2 : index
    %c0_9 = arith.constant 0 : index
    %8 = vector.load %arg3[%c2, %c0_9] : memref<3x128xi32, #tpu.memory_space<vmem>>, vector<1x128xi32>
    %9 = arith.sitofp %8 : vector<1x128xi32> to vector<1x128xf32>
    %10 = tpu.iota {dimensions = array<i32: 0>} : vector<384x128xi32>
    %11 = vector.broadcast %6 : vector<1x128xi32> to vector<384x128xi32>
    %12 = arith.cmpi eq, %10, %11 : vector<384x128xi32>
    %13 = arith.extui %12 : vector<384x128xi1> to vector<384x128xi32>
    %14 = arith.sitofp %13 : vector<384x128xi32> to vector<384x128xf32>
    %15 = tpu.iota {dimensions = array<i32: 0>} : vector<128x128xi32>
    %16 = vector.broadcast %7 : vector<1x128xi32> to vector<128x128xi32>
    %17 = arith.cmpi eq, %15, %16 : vector<128x128xi32>
    %18 = arith.extui %17 : vector<128x128xi1> to vector<128x128xi32>
    %19 = arith.sitofp %18 : vector<128x128xi32> to vector<128x128xf32>
    %c0_10 = arith.constant 0 : index
    %c0_11 = arith.constant 0 : index
    %c0_12 = arith.constant 0 : index
    %20 = vector.load %arg1[%c0_10, %c0_11, %c0_12] : memref<2x8x384xf32, #tpu.memory_space<vmem>>, vector<1x8x384xf32>
    %21 = vector.shape_cast %20 : vector<1x8x384xf32> to vector<8x384xf32>
    %c383_i32 = arith.constant 383 : i32
    %22 = tpu.dynamic_rotate %21 by %c383_i32 dim 1 : vector<8x384xf32>, i32 -> vector<8x384xf32>
    %c382_i32 = arith.constant 382 : i32
    %23 = tpu.dynamic_rotate %21 by %c382_i32 dim 1 : vector<8x384xf32>, i32 -> vector<8x384xf32>
    %c366_i32 = arith.constant 366 : i32
    %24 = tpu.dynamic_rotate %21 by %c366_i32 dim 1 : vector<8x384xf32>, i32 -> vector<8x384xf32>
    %c365_i32 = arith.constant 365 : i32
    %25 = tpu.dynamic_rotate %21 by %c365_i32 dim 1 : vector<8x384xf32>, i32 -> vector<8x384xf32>
    %c364_i32 = arith.constant 364 : i32
    %26 = tpu.dynamic_rotate %21 by %c364_i32 dim 1 : vector<8x384xf32>, i32 -> vector<8x384xf32>
    %c348_i32 = arith.constant 348 : i32
    %27 = tpu.dynamic_rotate %21 by %c348_i32 dim 1 : vector<8x384xf32>, i32 -> vector<8x384xf32>
    %c347_i32 = arith.constant 347 : i32
    %28 = tpu.dynamic_rotate %21 by %c347_i32 dim 1 : vector<8x384xf32>, i32 -> vector<8x384xf32>
    %c346_i32 = arith.constant 346 : i32
    %29 = tpu.dynamic_rotate %21 by %c346_i32 dim 1 : vector<8x384xf32>, i32 -> vector<8x384xf32>
    %30 = tpu.concatenate %21, %22, %23, %24, %25, %26, %27, %28, %29 in 0 : vector<8x384xf32>, vector<8x384xf32>, vector<8x384xf32>, vector<8x384xf32>, vector<8x384xf32>, vector<8x384xf32>, vector<8x384xf32>, vector<8x384xf32>, vector<8x384xf32> -> vector<72x384xf32>
    %cst = arith.constant dense<0.000000e+00> : vector<16x384xf32>
    %31 = tpu.matmul %2, %30, %cst {dimension_numbers = #tpu.dot_dimension_numbers<[1], [0], [0], [1], [0, 0, 1, 1], [], []>} : vector<16x72xf32>, vector<72x384xf32>, vector<16x384xf32> -> vector<16x384xf32>
    %32 = vector.broadcast %3 : vector<16x1xf32> to vector<16x384xf32>
    %33 = arith.addf %31, %32 : vector<16x384xf32>
    %cst_13 = arith.constant 0.000000e+00 : f32
    %34 = vector.broadcast %cst_13 : f32 to vector<16x384xf32>
    %35 = arith.maximumf %33, %34 : vector<16x384xf32>
    %c366_i32_14 = arith.constant 366 : i32
    %36 = tpu.dynamic_rotate %35 by %c366_i32_14 dim 1 : vector<16x384xf32>, i32 -> vector<16x384xf32>
    %37 = arith.maximumf %35, %36 : vector<16x384xf32>
    %c383_i32_15 = arith.constant 383 : i32
    %38 = tpu.dynamic_rotate %37 by %c383_i32_15 dim 1 : vector<16x384xf32>, i32 -> vector<16x384xf32>
    %39 = arith.maximumf %37, %38 : vector<16x384xf32>
    %cst_16 = arith.constant dense<0.000000e+00> : vector<16x128xf32>
    %40 = tpu.matmul %39, %14, %cst_16 {dimension_numbers = #tpu.dot_dimension_numbers<[1], [0], [0], [1], [0, 0, 1, 1], [], []>} : vector<16x384xf32>, vector<384x128xf32>, vector<16x128xf32> -> vector<16x128xf32>
    %c127_i32 = arith.constant 127 : i32
    %41 = tpu.dynamic_rotate %40 by %c127_i32 dim 1 : vector<16x128xf32>, i32 -> vector<16x128xf32>
    %c126_i32 = arith.constant 126 : i32
    %42 = tpu.dynamic_rotate %40 by %c126_i32 dim 1 : vector<16x128xf32>, i32 -> vector<16x128xf32>
    %c118_i32 = arith.constant 118 : i32
    %43 = tpu.dynamic_rotate %40 by %c118_i32 dim 1 : vector<16x128xf32>, i32 -> vector<16x128xf32>
    %c117_i32 = arith.constant 117 : i32
    %44 = tpu.dynamic_rotate %40 by %c117_i32 dim 1 : vector<16x128xf32>, i32 -> vector<16x128xf32>
    %c116_i32 = arith.constant 116 : i32
    %45 = tpu.dynamic_rotate %40 by %c116_i32 dim 1 : vector<16x128xf32>, i32 -> vector<16x128xf32>
    %c108_i32 = arith.constant 108 : i32
    %46 = tpu.dynamic_rotate %40 by %c108_i32 dim 1 : vector<16x128xf32>, i32 -> vector<16x128xf32>
    %c107_i32 = arith.constant 107 : i32
    %47 = tpu.dynamic_rotate %40 by %c107_i32 dim 1 : vector<16x128xf32>, i32 -> vector<16x128xf32>
    %c106_i32 = arith.constant 106 : i32
    %48 = tpu.dynamic_rotate %40 by %c106_i32 dim 1 : vector<16x128xf32>, i32 -> vector<16x128xf32>
    %49 = tpu.concatenate %40, %41, %42, %43, %44, %45, %46, %47, %48 in 0 : vector<16x128xf32>, vector<16x128xf32>, vector<16x128xf32>, vector<16x128xf32>, vector<16x128xf32>, vector<16x128xf32>, vector<16x128xf32>, vector<16x128xf32>, vector<16x128xf32> -> vector<144x128xf32>
    %cst_17 = arith.constant dense<0.000000e+00> : vector<32x128xf32>
    %50 = tpu.matmul %1, %49, %cst_17 {dimension_numbers = #tpu.dot_dimension_numbers<[1], [0], [0], [1], [0, 0, 1, 1], [], []>} : vector<32x144xf32>, vector<144x128xf32>, vector<32x128xf32> -> vector<32x128xf32>
    %51 = vector.broadcast %4 : vector<32x1xf32> to vector<32x128xf32>
    %52 = arith.addf %50, %51 : vector<32x128xf32>
    %cst_18 = arith.constant 0.000000e+00 : f32
    %53 = vector.broadcast %cst_18 : f32 to vector<32x128xf32>
    %54 = arith.maximumf %52, %53 : vector<32x128xf32>
    %c118_i32_19 = arith.constant 118 : i32
    %55 = tpu.dynamic_rotate %54 by %c118_i32_19 dim 1 : vector<32x128xf32>, i32 -> vector<32x128xf32>
    %56 = arith.maximumf %54, %55 : vector<32x128xf32>
    %c127_i32_20 = arith.constant 127 : i32
    %57 = tpu.dynamic_rotate %56 by %c127_i32_20 dim 1 : vector<32x128xf32>, i32 -> vector<32x128xf32>
    %58 = arith.maximumf %56, %57 : vector<32x128xf32>
    %cst_21 = arith.constant dense<0.000000e+00> : vector<32x128xf32>
    %59 = tpu.matmul %58, %19, %cst_21 {dimension_numbers = #tpu.dot_dimension_numbers<[1], [0], [0], [1], [0, 0, 1, 1], [], []>} : vector<32x128xf32>, vector<128x128xf32>, vector<32x128xf32> -> vector<32x128xf32>
    %c127_i32_22 = arith.constant 127 : i32
    %60 = tpu.dynamic_rotate %59 by %c127_i32_22 dim 1 : vector<32x128xf32>, i32 -> vector<32x128xf32>
    %c126_i32_23 = arith.constant 126 : i32
    %61 = tpu.dynamic_rotate %59 by %c126_i32_23 dim 1 : vector<32x128xf32>, i32 -> vector<32x128xf32>
    %c122_i32 = arith.constant 122 : i32
    %62 = tpu.dynamic_rotate %59 by %c122_i32 dim 1 : vector<32x128xf32>, i32 -> vector<32x128xf32>
    %c121_i32 = arith.constant 121 : i32
    %63 = tpu.dynamic_rotate %59 by %c121_i32 dim 1 : vector<32x128xf32>, i32 -> vector<32x128xf32>
    %c120_i32 = arith.constant 120 : i32
    %64 = tpu.dynamic_rotate %59 by %c120_i32 dim 1 : vector<32x128xf32>, i32 -> vector<32x128xf32>
    %c116_i32_24 = arith.constant 116 : i32
    %65 = tpu.dynamic_rotate %59 by %c116_i32_24 dim 1 : vector<32x128xf32>, i32 -> vector<32x128xf32>
    %c115_i32 = arith.constant 115 : i32
    %66 = tpu.dynamic_rotate %59 by %c115_i32 dim 1 : vector<32x128xf32>, i32 -> vector<32x128xf32>
    %c114_i32 = arith.constant 114 : i32
    %67 = tpu.dynamic_rotate %59 by %c114_i32 dim 1 : vector<32x128xf32>, i32 -> vector<32x128xf32>
    %68 = tpu.concatenate %59, %60, %61, %62, %63, %64, %65, %66, %67 in 0 : vector<32x128xf32>, vector<32x128xf32>, vector<32x128xf32>, vector<32x128xf32>, vector<32x128xf32>, vector<32x128xf32>, vector<32x128xf32>, vector<32x128xf32>, vector<32x128xf32> -> vector<288x128xf32>
    %cst_25 = arith.constant dense<0.000000e+00> : vector<64x128xf32>
    %69 = tpu.matmul %0, %68, %cst_25 {dimension_numbers = #tpu.dot_dimension_numbers<[1], [0], [0], [1], [0, 0, 1, 1], [], []>} : vector<64x288xf32>, vector<288x128xf32>, vector<64x128xf32> -> vector<64x128xf32>
    %70 = vector.broadcast %5 : vector<64x1xf32> to vector<64x128xf32>
    %71 = arith.addf %69, %70 : vector<64x128xf32>
    %cst_26 = arith.constant 0.000000e+00 : f32
    %72 = vector.broadcast %cst_26 : f32 to vector<64x128xf32>
    %73 = arith.maximumf %71, %72 : vector<64x128xf32>
    %74 = vector.broadcast %9 : vector<1x128xf32> to vector<64x128xf32>
    %75 = arith.mulf %73, %74 : vector<64x128xf32>
    %cst_27 = arith.constant dense<0.000000e+00> : vector<64xf32>
    %76 = vector.multi_reduction <add>, %75, %cst_27 [1] : vector<64x128xf32> to vector<64xf32>
    %77 = vector.shape_cast %76 : vector<64xf32> to vector<64x1xf32>
    %cst_28 = arith.constant 6.250000e-02 : f32
    %78 = vector.broadcast %cst_28 : f32 to vector<64x1xf32>
    %79 = arith.mulf %77, %78 : vector<64x1xf32>
    %c1_29 = arith.constant 1 : index
    %c0_30 = arith.constant 0 : index
    %c0_31 = arith.constant 0 : index
    %80 = vector.load %arg1[%c1_29, %c0_30, %c0_31] : memref<2x8x384xf32, #tpu.memory_space<vmem>>, vector<1x8x384xf32>
    %81 = vector.shape_cast %80 : vector<1x8x384xf32> to vector<8x384xf32>
    %c383_i32_32 = arith.constant 383 : i32
    %82 = tpu.dynamic_rotate %81 by %c383_i32_32 dim 1 : vector<8x384xf32>, i32 -> vector<8x384xf32>
    %c382_i32_33 = arith.constant 382 : i32
    %83 = tpu.dynamic_rotate %81 by %c382_i32_33 dim 1 : vector<8x384xf32>, i32 -> vector<8x384xf32>
    %c366_i32_34 = arith.constant 366 : i32
    %84 = tpu.dynamic_rotate %81 by %c366_i32_34 dim 1 : vector<8x384xf32>, i32 -> vector<8x384xf32>
    %c365_i32_35 = arith.constant 365 : i32
    %85 = tpu.dynamic_rotate %81 by %c365_i32_35 dim 1 : vector<8x384xf32>, i32 -> vector<8x384xf32>
    %c364_i32_36 = arith.constant 364 : i32
    %86 = tpu.dynamic_rotate %81 by %c364_i32_36 dim 1 : vector<8x384xf32>, i32 -> vector<8x384xf32>
    %c348_i32_37 = arith.constant 348 : i32
    %87 = tpu.dynamic_rotate %81 by %c348_i32_37 dim 1 : vector<8x384xf32>, i32 -> vector<8x384xf32>
    %c347_i32_38 = arith.constant 347 : i32
    %88 = tpu.dynamic_rotate %81 by %c347_i32_38 dim 1 : vector<8x384xf32>, i32 -> vector<8x384xf32>
    %c346_i32_39 = arith.constant 346 : i32
    %89 = tpu.dynamic_rotate %81 by %c346_i32_39 dim 1 : vector<8x384xf32>, i32 -> vector<8x384xf32>
    %90 = tpu.concatenate %81, %82, %83, %84, %85, %86, %87, %88, %89 in 0 : vector<8x384xf32>, vector<8x384xf32>, vector<8x384xf32>, vector<8x384xf32>, vector<8x384xf32>, vector<8x384xf32>, vector<8x384xf32>, vector<8x384xf32>, vector<8x384xf32> -> vector<72x384xf32>
    %cst_40 = arith.constant dense<0.000000e+00> : vector<16x384xf32>
    %91 = tpu.matmul %2, %90, %cst_40 {dimension_numbers = #tpu.dot_dimension_numbers<[1], [0], [0], [1], [0, 0, 1, 1], [], []>} : vector<16x72xf32>, vector<72x384xf32>, vector<16x384xf32> -> vector<16x384xf32>
    %92 = vector.broadcast %3 : vector<16x1xf32> to vector<16x384xf32>
    %93 = arith.addf %91, %92 : vector<16x384xf32>
    %cst_41 = arith.constant 0.000000e+00 : f32
    %94 = vector.broadcast %cst_41 : f32 to vector<16x384xf32>
    %95 = arith.maximumf %93, %94 : vector<16x384xf32>
    %c366_i32_42 = arith.constant 366 : i32
    %96 = tpu.dynamic_rotate %95 by %c366_i32_42 dim 1 : vector<16x384xf32>, i32 -> vector<16x384xf32>
    %97 = arith.maximumf %95, %96 : vector<16x384xf32>
    %c383_i32_43 = arith.constant 383 : i32
    %98 = tpu.dynamic_rotate %97 by %c383_i32_43 dim 1 : vector<16x384xf32>, i32 -> vector<16x384xf32>
    %99 = arith.maximumf %97, %98 : vector<16x384xf32>
    %cst_44 = arith.constant dense<0.000000e+00> : vector<16x128xf32>
    %100 = tpu.matmul %99, %14, %cst_44 {dimension_numbers = #tpu.dot_dimension_numbers<[1], [0], [0], [1], [0, 0, 1, 1], [], []>} : vector<16x384xf32>, vector<384x128xf32>, vector<16x128xf32> -> vector<16x128xf32>
    %c127_i32_45 = arith.constant 127 : i32
    %101 = tpu.dynamic_rotate %100 by %c127_i32_45 dim 1 : vector<16x128xf32>, i32 -> vector<16x128xf32>
    %c126_i32_46 = arith.constant 126 : i32
    %102 = tpu.dynamic_rotate %100 by %c126_i32_46 dim 1 : vector<16x128xf32>, i32 -> vector<16x128xf32>
    %c118_i32_47 = arith.constant 118 : i32
    %103 = tpu.dynamic_rotate %100 by %c118_i32_47 dim 1 : vector<16x128xf32>, i32 -> vector<16x128xf32>
    %c117_i32_48 = arith.constant 117 : i32
    %104 = tpu.dynamic_rotate %100 by %c117_i32_48 dim 1 : vector<16x128xf32>, i32 -> vector<16x128xf32>
    %c116_i32_49 = arith.constant 116 : i32
    %105 = tpu.dynamic_rotate %100 by %c116_i32_49 dim 1 : vector<16x128xf32>, i32 -> vector<16x128xf32>
    %c108_i32_50 = arith.constant 108 : i32
    %106 = tpu.dynamic_rotate %100 by %c108_i32_50 dim 1 : vector<16x128xf32>, i32 -> vector<16x128xf32>
    %c107_i32_51 = arith.constant 107 : i32
    %107 = tpu.dynamic_rotate %100 by %c107_i32_51 dim 1 : vector<16x128xf32>, i32 -> vector<16x128xf32>
    %c106_i32_52 = arith.constant 106 : i32
    %108 = tpu.dynamic_rotate %100 by %c106_i32_52 dim 1 : vector<16x128xf32>, i32 -> vector<16x128xf32>
    %109 = tpu.concatenate %100, %101, %102, %103, %104, %105, %106, %107, %108 in 0 : vector<16x128xf32>, vector<16x128xf32>, vector<16x128xf32>, vector<16x128xf32>, vector<16x128xf32>, vector<16x128xf32>, vector<16x128xf32>, vector<16x128xf32>, vector<16x128xf32> -> vector<144x128xf32>
    %cst_53 = arith.constant dense<0.000000e+00> : vector<32x128xf32>
    %110 = tpu.matmul %1, %109, %cst_53 {dimension_numbers = #tpu.dot_dimension_numbers<[1], [0], [0], [1], [0, 0, 1, 1], [], []>} : vector<32x144xf32>, vector<144x128xf32>, vector<32x128xf32> -> vector<32x128xf32>
    %111 = vector.broadcast %4 : vector<32x1xf32> to vector<32x128xf32>
    %112 = arith.addf %110, %111 : vector<32x128xf32>
    %cst_54 = arith.constant 0.000000e+00 : f32
    %113 = vector.broadcast %cst_54 : f32 to vector<32x128xf32>
    %114 = arith.maximumf %112, %113 : vector<32x128xf32>
    %c118_i32_55 = arith.constant 118 : i32
    %115 = tpu.dynamic_rotate %114 by %c118_i32_55 dim 1 : vector<32x128xf32>, i32 -> vector<32x128xf32>
    %116 = arith.maximumf %114, %115 : vector<32x128xf32>
    %c127_i32_56 = arith.constant 127 : i32
    %117 = tpu.dynamic_rotate %116 by %c127_i32_56 dim 1 : vector<32x128xf32>, i32 -> vector<32x128xf32>
    %118 = arith.maximumf %116, %117 : vector<32x128xf32>
    %cst_57 = arith.constant dense<0.000000e+00> : vector<32x128xf32>
    %119 = tpu.matmul %118, %19, %cst_57 {dimension_numbers = #tpu.dot_dimension_numbers<[1], [0], [0], [1], [0, 0, 1, 1], [], []>} : vector<32x128xf32>, vector<128x128xf32>, vector<32x128xf32> -> vector<32x128xf32>
    %c127_i32_58 = arith.constant 127 : i32
    %120 = tpu.dynamic_rotate %119 by %c127_i32_58 dim 1 : vector<32x128xf32>, i32 -> vector<32x128xf32>
    %c126_i32_59 = arith.constant 126 : i32
    %121 = tpu.dynamic_rotate %119 by %c126_i32_59 dim 1 : vector<32x128xf32>, i32 -> vector<32x128xf32>
    %c122_i32_60 = arith.constant 122 : i32
    %122 = tpu.dynamic_rotate %119 by %c122_i32_60 dim 1 : vector<32x128xf32>, i32 -> vector<32x128xf32>
    %c121_i32_61 = arith.constant 121 : i32
    %123 = tpu.dynamic_rotate %119 by %c121_i32_61 dim 1 : vector<32x128xf32>, i32 -> vector<32x128xf32>
    %c120_i32_62 = arith.constant 120 : i32
    %124 = tpu.dynamic_rotate %119 by %c120_i32_62 dim 1 : vector<32x128xf32>, i32 -> vector<32x128xf32>
    %c116_i32_63 = arith.constant 116 : i32
    %125 = tpu.dynamic_rotate %119 by %c116_i32_63 dim 1 : vector<32x128xf32>, i32 -> vector<32x128xf32>
    %c115_i32_64 = arith.constant 115 : i32
    %126 = tpu.dynamic_rotate %119 by %c115_i32_64 dim 1 : vector<32x128xf32>, i32 -> vector<32x128xf32>
    %c114_i32_65 = arith.constant 114 : i32
    %127 = tpu.dynamic_rotate %119 by %c114_i32_65 dim 1 : vector<32x128xf32>, i32 -> vector<32x128xf32>
    %128 = tpu.concatenate %119, %120, %121, %122, %123, %124, %125, %126, %127 in 0 : vector<32x128xf32>, vector<32x128xf32>, vector<32x128xf32>, vector<32x128xf32>, vector<32x128xf32>, vector<32x128xf32>, vector<32x128xf32>, vector<32x128xf32>, vector<32x128xf32> -> vector<288x128xf32>
    %cst_66 = arith.constant dense<0.000000e+00> : vector<64x128xf32>
    %129 = tpu.matmul %0, %128, %cst_66 {dimension_numbers = #tpu.dot_dimension_numbers<[1], [0], [0], [1], [0, 0, 1, 1], [], []>} : vector<64x288xf32>, vector<288x128xf32>, vector<64x128xf32> -> vector<64x128xf32>
    %130 = vector.broadcast %5 : vector<64x1xf32> to vector<64x128xf32>
    %131 = arith.addf %129, %130 : vector<64x128xf32>
    %cst_67 = arith.constant 0.000000e+00 : f32
    %132 = vector.broadcast %cst_67 : f32 to vector<64x128xf32>
    %133 = arith.maximumf %131, %132 : vector<64x128xf32>
    %134 = vector.broadcast %9 : vector<1x128xf32> to vector<64x128xf32>
    %135 = arith.mulf %133, %134 : vector<64x128xf32>
    %cst_68 = arith.constant dense<0.000000e+00> : vector<64xf32>
    %136 = vector.multi_reduction <add>, %135, %cst_68 [1] : vector<64x128xf32> to vector<64xf32>
    %137 = vector.shape_cast %136 : vector<64xf32> to vector<64x1xf32>
    %cst_69 = arith.constant 6.250000e-02 : f32
    %138 = vector.broadcast %cst_69 : f32 to vector<64x1xf32>
    %139 = arith.mulf %137, %138 : vector<64x1xf32>
    %140 = tpu.concatenate %79, %139 in 1 : vector<64x1xf32>, vector<64x1xf32> -> vector<64x2xf32>
    %c0_70 = arith.constant 0 : index
    %c0_71 = arith.constant 0 : index
    %141 = vector.load %arg4[%c0_70, %c0_71] : memref<64x2xf32, #tpu.memory_space<vmem>>, vector<64x2xf32>
    tpu.vector_store %arg4[%c0_70, %c0_71], %140 {strides = array<i32>} : memref<64x2xf32, #tpu.memory_space<vmem>>, vector<64x2xf32>,
    return
  }
  func.func @transform_0(%arg0: i32) -> (i32, i32, i32) {
    %c0_i32 = arith.constant 0 : i32
    %c0_i32_0 = arith.constant 0 : i32
    %c0_i32_1 = arith.constant 0 : i32
    %c0_i32_2 = arith.constant 0 : i32
    return %c0_i32, %c0_i32_0, %c0_i32_1 : i32, i32, i32
  }
  func.func @transform_1(%arg0: i32) -> (i32, i32) {
    %c0_i32 = arith.constant 0 : i32
    %c0_i32_0 = arith.constant 0 : i32
    %c0_i32_1 = arith.constant 0 : i32
    return %c0_i32, %c0_i32_0 : i32, i32
  }
  func.func @transform_2(%arg0: i32) -> (i32, i32) {
    %c0_i32 = arith.constant 0 : i32
    %c0_i32_0 = arith.constant 0 : i32
    %c0_i32_1 = arith.constant 0 : i32
    return %c0_i32, %c0_i32_0 : i32, i32
  }
  func.func @transform_3(%arg0: i32) -> (i32, i32) {
    %c0_i32 = arith.constant 0 : i32
    %c0_i32_0 = arith.constant 0 : i32
    %c0_i32_1 = arith.constant 0 : i32
    return %c0_i32, %c0_i32_0 : i32, i32
  }
}

</mosaic_0001>

<llo_original>
// kernel: cnn_encoder_forward.1
$region0: #{cnn_encoder_forward.1}
  #allocation0 [shape = 'u32[]', space=smem, size = 0x4, offset = 0x4, fixed_abs, tag = 'smem constant byte address 0x4 - core index']
  #allocation1 [shape = 'u32[144,128]{1,0:T(1,128)}', space=vmem, size = 0x12000, scoped, tag = 'internal scratch']
  %s0 = inlined_call_operand.vmem [shape: f32[2,8,384], index: 0, kind: input, shape index: {}]
  %s1 = inlined_call_operand.vmem [shape: f32[64,507], index: 1, kind: input, shape index: {}]
  %s2 = inlined_call_operand.vmem [shape: s32[3,128], index: 2, kind: input, shape index: {}]
  %s3 = inlined_call_operand.vmem [shape: f32[64,2], index: 3, kind: output, shape index: {}]
  %s4 = sld [smem:[#allocation0]]
  $region22: #{cnn_encoder_forward.1} parent=0
    _
  %s6 = ssub.s32 1, %s4
  %s7 = scalar_select 0, %s6, %s4
  // Predicated region
  $region2: #{cnn_encoder_forward.1} parent=0 // pred_check
    _
  $region3: #{cnn_encoder_forward.1} parent=0 // pred_check_branch
    %9 = sbr.rel (0) target = $region5
  $region4: #{cnn_encoder_forward.1} parent=0 // pred_region
    _
  $region5: #{cnn_encoder_forward.1} parent=0 // pred_fallthru
    _
  // Predicated region
  $region6: #{cnn_encoder_forward.1} parent=0 // pred_check
    _
  $region7: #{cnn_encoder_forward.1} parent=0 // pred_check_branch
    %11 = sbr.rel (0) target = $region9
  $region8: #{cnn_encoder_forward.1} parent=0 // pred_region
    _
  $region9: #{cnn_encoder_forward.1} parent=0 // pred_fallthru
    _
  // Predicated region
  $region10: #{cnn_encoder_forward.1} parent=0 // pred_check
    _
  $region11: #{cnn_encoder_forward.1} parent=0 // pred_check_branch
    %13 = sbr.rel (0) target = $region13
  $region12: #{cnn_encoder_forward.1} parent=0 // pred_region
    _
  $region13: #{cnn_encoder_forward.1} parent=0 // pred_fallthru
    _
  %v14 = vld [vmem:[%s1] sm:$0xff]
  %v15 = vld [vmem:[%s1 + $0x8] sm:$0xff]
  %v16 = vld [vmem:[%s1 + $0x10] sm:$0xff]
  %v17 = vld [vmem:[%s1 + $0x20] sm:$0xff]
  %v18 = vld [vmem:[%s1 + $0x28] sm:$0xff]
  %v19 = vld [vmem:[%s1 + $0x30] sm:$0xff]
  %v20 = vld [vmem:[%s1 + $0x40] sm:$0xff]
  %v21 = vld [vmem:[%s1 + $0x48] sm:$0xff]
  %v22 = vld [vmem:[%s1 + $0x50] sm:$0xff]
  %v23 = vld [vmem:[%s1 + $0x60] sm:$0xff]
  %v24 = vld [vmem:[%s1 + $0x68] sm:$0xff]
  %v25 = vld [vmem:[%s1 + $0x70] sm:$0xff]
  %v26 = vld [vmem:[%s1 + $0x80] sm:$0xff]
  %v27 = vld [vmem:[%s1 + $0x88] sm:$0xff]
  %v28 = vld [vmem:[%s1 + $0x90] sm:$0xff]
  %v29 = vld [vmem:[%s1 + $0xa0] sm:$0xff]
  %v30 = vld [vmem:[%s1 + $0xa8] sm:$0xff]
  %v31 = vld [vmem:[%s1 + $0xb0] sm:$0xff]
  %v32 = vld [vmem:[%s1 + $0xc0] sm:$0xff]
  %v33 = vld [vmem:[%s1 + $0xc8] sm:$0xff]
  %v34 = vld [vmem:[%s1 + $0xd0] sm:$0xff]
  %v35 = vld [vmem:[%s1 + $0xe0] sm:$0xff]
  %v36 = vld [vmem:[%s1 + $0xe8] sm:$0xff]
  %v37 = vld [vmem:[%s1 + $0xf0] sm:$0xff]
  %v38 = vld [vmem:[%s1 + $0x18] sm:$0xff]
  %v39 = vld [vmem:[%s1 + $0x38] sm:$0xff]
  %v40 = vld [vmem:[%s1 + $0x58] sm:$0xff]
  %v41 = vld [vmem:[%s1 + $0x78] sm:$0xff]
  %v42 = vld [vmem:[%s1 + $0x98] sm:$0xff]
  %v43 = vld [vmem:[%s1 + $0xb8] sm:$0xff]
  %v44 = vld [vmem:[%s1 + $0xd8] sm:$0xff]
  %v45 = vld [vmem:[%s1 + $0xf8] sm:$0xff]
  %v46 = vld [vmem:[%s2] sm:$0x1]
  %v47 = vld [vmem:[%s2 + $0x1] sm:$0x1]
  %v48 = vld [vmem:[%s2 + $0x2] sm:$0x1]
  %v49 = vcvt.s32.f32 %v48
  %v50 = vlaneseq
  %v51 = vshrl.u32 %v50, 7
  %v52 = vadd.s32 %v51, 8
  %v53 = vadd.s32 %v51, 16
  %v54 = vadd.s32 %v51, 24
  %v55 = vadd.s32 %v51, 32
  %v56 = vadd.s32 %v51, 40
  %v57 = vadd.s32 %v51, 48
  %v58 = vadd.s32 %v51, 56
  %v59 = vadd.s32 %v51, 64
  %v60 = vadd.s32 %v51, 72
  %v61 = vadd.s32 %v51, 80
  %v62 = vadd.s32 %v51, 88
  %v63 = vadd.s32 %v51, 96
  %v64 = vadd.s32 %v51, 104
  %v65 = vadd.s32 %v51, 112
  %v66 = vadd.s32 %v51, 120
  %v67 = vadd.s32 %v51, 128
  %v68 = vadd.s32 %v51, 136
  %v69 = vadd.s32 %v51, 144
  %v70 = vadd.s32 %v51, 152
  %v71 = vadd.s32 %v51, 160
  %v72 = vadd.s32 %v51, 168
  %v73 = vadd.s32 %v51, 176
  %v74 = vadd.s32 %v51, 184
  %v75 = vadd.s32 %v51, 192
  %v76 = vadd.s32 %v51, 200
  %v77 = vadd.s32 %v51, 208
  %v78 = vadd.s32 %v51, 216
  %v79 = vadd.s32 %v51, 224
  %v80 = vadd.s32 %v51, 232
  %v81 = vadd.s32 %v51, 240
  %v82 = vadd.s32 %v51, 248
  %v83 = vadd.s32 %v51, 256
  %v84 = vadd.s32 %v51, 264
  %v85 = vadd.s32 %v51, 272
  %v86 = vadd.s32 %v51, 280
  %v87 = vadd.s32 %v51, 288
  %v88 = vadd.s32 %v51, 296
  %v89 = vadd.s32 %v51, 304
  %v90 = vadd.s32 %v51, 312
  %v91 = vadd.s32 %v51, 320
  %v92 = vadd.s32 %v51, 328
  %v93 = vadd.s32 %v51, 336
  %v94 = vadd.s32 %v51, 344
  %v95 = vadd.s32 %v51, 352
  %v96 = vadd.s32 %v51, 360
  %v97 = vadd.s32 %v51, 368
  %v98 = vadd.s32 %v51, 376
  %v99 = vlaneseq
  %v100 = vshrl.u32 %v99, 7
  %v101 = vsub.s32 0, %v100
  %v102 = vrot.slane %v46, %v101
  %vm103 = vcmp.eq.s32.totalorder %v51, %v102
  %vm104 = vcmp.eq.s32.totalorder %v52, %v102
  %vm105 = vcmp.eq.s32.totalorder %v53, %v102
  %vm106 = vcmp.eq.s32.totalorder %v54, %v102
  %vm107 = vcmp.eq.s32.totalorder %v55, %v102
  %vm108 = vcmp.eq.s32.totalorder %v56, %v102
  %vm109 = vcmp.eq.s32.totalorder %v57, %v102
  %vm110 = vcmp.eq.s32.totalorder %v58, %v102
  %vm111 = vcmp.eq.s32.totalorder %v59, %v102
  %vm112 = vcmp.eq.s32.totalorder %v60, %v102
  %vm113 = vcmp.eq.s32.totalorder %v61, %v102
  %vm114 = vcmp.eq.s32.totalorder %v62, %v102
  %vm115 = vcmp.eq.s32.totalorder %v63, %v102
  %vm116 = vcmp.eq.s32.totalorder %v64, %v102
  %vm117 = vcmp.eq.s32.totalorder %v65, %v102
  %vm118 = vcmp.eq.s32.totalorder %v66, %v102
  %vm119 = vcmp.eq.s32.totalorder %v67, %v102
  %vm120 = vcmp.eq.s32.totalorder %v68, %v102
  %vm121 = vcmp.eq.s32.totalorder %v69, %v102
  %vm122 = vcmp.eq.s32.totalorder %v70, %v102
  %vm123 = vcmp.eq.s32.totalorder %v71, %v102
  %vm124 = vcmp.eq.s32.totalorder %v72, %v102
  %vm125 = vcmp.eq.s32.totalorder %v73, %v102
  %vm126 = vcmp.eq.s32.totalorder %v74, %v102
  %vm127 = vcmp.eq.s32.totalorder %v75, %v102
  %vm128 = vcmp.eq.s32.totalorder %v76, %v102
  %vm129 = vcmp.eq.s32.totalorder %v77, %v102
  %vm130 = vcmp.eq.s32.totalorder %v78, %v102
  %vm131 = vcmp.eq.s32.totalorder %v79, %v102
  %vm132 = vcmp.eq.s32.totalorder %v80, %v102
  %vm133 = vcmp.eq.s32.totalorder %v81, %v102
  %vm134 = vcmp.eq.s32.totalorder %v82, %v102
  %vm135 = vcmp.eq.s32.totalorder %v83, %v102
  %vm136 = vcmp.eq.s32.totalorder %v84, %v102
  %vm137 = vcmp.eq.s32.totalorder %v85, %v102
  %vm138 = vcmp.eq.s32.totalorder %v86, %v102
  %vm139 = vcmp.eq.s32.totalorder %v87, %v102
  %vm140 = vcmp.eq.s32.totalorder %v88, %v102
  %vm141 = vcmp.eq.s32.totalorder %v89, %v102
  %vm142 = vcmp.eq.s32.totalorder %v90, %v102
  %vm143 = vcmp.eq.s32.totalorder %v91, %v102
  %vm144 = vcmp.eq.s32.totalorder %v92, %v102
  %vm145 = vcmp.eq.s32.totalorder %v93, %v102
  %vm146 = vcmp.eq.s32.totalorder %v94, %v102
  %vm147 = vcmp.eq.s32.totalorder %v95, %v102
  %vm148 = vcmp.eq.s32.totalorder %v96, %v102
  %vm149 = vcmp.eq.s32.totalorder %v97, %v102
  %vm150 = vcmp.eq.s32.totalorder %v98, %v102
  %v151 = vsel %vm103, 1, 0
  %v152 = vsel %vm104, 1, 0
  %v153 = vsel %vm105, 1, 0
  %v154 = vsel %vm106, 1, 0
  %v155 = vsel %vm107, 1, 0
  %v156 = vsel %vm108, 1, 0
  %v157 = vsel %vm109, 1, 0
  %v158 = vsel %vm110, 1, 0
  %v159 = vsel %vm111, 1, 0
  %v160 = vsel %vm112, 1, 0
  %v161 = vsel %vm113, 1, 0
  %v162 = vsel %vm114, 1, 0
  %v163 = vsel %vm115, 1, 0
  %v164 = vsel %vm116, 1, 0
  %v165 = vsel %vm117, 1, 0
  %v166 = vsel %vm118, 1, 0
  %v167 = vsel %vm119, 1, 0
  %v168 = vsel %vm120, 1, 0
  %v169 = vsel %vm121, 1, 0
  %v170 = vsel %vm122, 1, 0
  %v171 = vsel %vm123, 1, 0
  %v172 = vsel %vm124, 1, 0
  %v173 = vsel %vm125, 1, 0
  %v174 = vsel %vm126, 1, 0
  %v175 = vsel %vm127, 1, 0
  %v176 = vsel %vm128, 1, 0
  %v177 = vsel %vm129, 1, 0
  %v178 = vsel %vm130, 1, 0
  %v179 = vsel %vm131, 1, 0
  %v180 = vsel %vm132, 1, 0
  %v181 = vsel %vm133, 1, 0
  %v182 = vsel %vm134, 1, 0
  %v183 = vsel %vm135, 1, 0
  %v184 = vsel %vm136, 1, 0
  %v185 = vsel %vm137, 1, 0
  %v186 = vsel %vm138, 1, 0
  %v187 = vsel %vm139, 1, 0
  %v188 = vsel %vm140, 1, 0
  %v189 = vsel %vm141, 1, 0
  %v190 = vsel %vm142, 1, 0
  %v191 = vsel %vm143, 1, 0
  %v192 = vsel %vm144, 1, 0
  %v193 = vsel %vm145, 1, 0
  %v194 = vsel %vm146, 1, 0
  %v195 = vsel %vm147, 1, 0
  %v196 = vsel %vm148, 1, 0
  %v197 = vsel %vm149, 1, 0
  %v198 = vsel %vm150, 1, 0
  %v199 = vcvt.s32.f32 %v151
  %v200 = vcvt.s32.f32 %v152
  %v201 = vcvt.s32.f32 %v153
  %v202 = vcvt.s32.f32 %v154
  %v203 = vcvt.s32.f32 %v155
  %v204 = vcvt.s32.f32 %v156
  %v205 = vcvt.s32.f32 %v157
  %v206 = vcvt.s32.f32 %v158
  %v207 = vcvt.s32.f32 %v159
  %v208 = vcvt.s32.f32 %v160
  %v209 = vcvt.s32.f32 %v161
  %v210 = vcvt.s32.f32 %v162
  %v211 = vcvt.s32.f32 %v163
  %v212 = vcvt.s32.f32 %v164
  %v213 = vcvt.s32.f32 %v165
  %v214 = vcvt.s32.f32 %v166
  %v215 = vcvt.s32.f32 %v167
  %v216 = vcvt.s32.f32 %v168
  %v217 = vcvt.s32.f32 %v169
  %v218 = vcvt.s32.f32 %v170
  %v219 = vcvt.s32.f32 %v171
  %v220 = vcvt.s32.f32 %v172
  %v221 = vcvt.s32.f32 %v173
  %v222 = vcvt.s32.f32 %v174
  %v223 = vcvt.s32.f32 %v175
  %v224 = vcvt.s32.f32 %v176
  %v225 = vcvt.s32.f32 %v177
  %v226 = vcvt.s32.f32 %v178
  %v227 = vcvt.s32.f32 %v179
  %v228 = vcvt.s32.f32 %v180
  %v229 = vcvt.s32.f32 %v181
  %v230 = vcvt.s32.f32 %v182
  %v231 = vcvt.s32.f32 %v183
  %v232 = vcvt.s32.f32 %v184
  %v233 = vcvt.s32.f32 %v185
  %v234 = vcvt.s32.f32 %v186
  %v235 = vcvt.s32.f32 %v187
  %v236 = vcvt.s32.f32 %v188
  %v237 = vcvt.s32.f32 %v189
  %v238 = vcvt.s32.f32 %v190
  %v239 = vcvt.s32.f32 %v191
  %v240 = vcvt.s32.f32 %v192
  %v241 = vcvt.s32.f32 %v193
  %v242 = vcvt.s32.f32 %v194
  %v243 = vcvt.s32.f32 %v195
  %v244 = vcvt.s32.f32 %v196
  %v245 = vcvt.s32.f32 %v197
  %v246 = vcvt.s32.f32 %v198
  %v247 = vlaneseq
  %v248 = vshrl.u32 %v247, 7
  %v249 = vsub.s32 0, %v248
  %v250 = vrot.slane %v47, %v249
  %vm251 = vcmp.eq.s32.totalorder %v51, %v250
  %vm252 = vcmp.eq.s32.totalorder %v52, %v250
  %vm253 = vcmp.eq.s32.totalorder %v53, %v250
  %vm254 = vcmp.eq.s32.totalorder %v54, %v250
  %vm255 = vcmp.eq.s32.totalorder %v55, %v250
  %vm256 = vcmp.eq.s32.totalorder %v56, %v250
  %vm257 = vcmp.eq.s32.totalorder %v57, %v250
  %vm258 = vcmp.eq.s32.totalorder %v58, %v250
  %vm259 = vcmp.eq.s32.totalorder %v59, %v250
  %vm260 = vcmp.eq.s32.totalorder %v60, %v250
  %vm261 = vcmp.eq.s32.totalorder %v61, %v250
  %vm262 = vcmp.eq.s32.totalorder %v62, %v250
  %vm263 = vcmp.eq.s32.totalorder %v63, %v250
  %vm264 = vcmp.eq.s32.totalorder %v64, %v250
  %vm265 = vcmp.eq.s32.totalorder %v65, %v250
  %vm266 = vcmp.eq.s32.totalorder %v66, %v250
  %v267 = vsel %vm251, 1, 0
  %v268 = vsel %vm252, 1, 0
  %v269 = vsel %vm253, 1, 0
  %v270 = vsel %vm254, 1, 0
  %v271 = vsel %vm255, 1, 0
  %v272 = vsel %vm256, 1, 0
  %v273 = vsel %vm257, 1, 0
  %v274 = vsel %vm258, 1, 0
  %v275 = vsel %vm259, 1, 0
  %v276 = vsel %vm260, 1, 0
  %v277 = vsel %vm261, 1, 0
  %v278 = vsel %vm262, 1, 0
  %v279 = vsel %vm263, 1, 0
  %v280 = vsel %vm264, 1, 0
  %v281 = vsel %vm265, 1, 0
  %v282 = vsel %vm266, 1, 0
  %v283 = vcvt.s32.f32 %v267
  %v284 = vcvt.s32.f32 %v268
  %v285 = vcvt.s32.f32 %v269
  %v286 = vcvt.s32.f32 %v270
  %v287 = vcvt.s32.f32 %v271
  %v288 = vcvt.s32.f32 %v272
  %v289 = vcvt.s32.f32 %v273
  %v290 = vcvt.s32.f32 %v274
  %v291 = vcvt.s32.f32 %v275
  %v292 = vcvt.s32.f32 %v276
  %v293 = vcvt.s32.f32 %v277
  %v294 = vcvt.s32.f32 %v278
  %v295 = vcvt.s32.f32 %v279
  %v296 = vcvt.s32.f32 %v280
  %v297 = vcvt.s32.f32 %v281
  %v298 = vcvt.s32.f32 %v282
  %v299 = vld [vmem:[%s0] sm:$0xff]
  %v300 = vld [vmem:[%s0 + $0x8] sm:$0xff]
  %v301 = vld [vmem:[%s0 + $0x10] sm:$0xff]
  %302 = vrot.lane.b32.xlu0 %v299, 127
  %v303 = vpop.permute.xlu0 %302
  %304 = vrot.lane.b32.xlu0 %v300, 127
  %v305 = vpop.permute.xlu0 %304
  %306 = vrot.lane.b32.xlu0 %v301, 127
  %v307 = vpop.permute.xlu0 %306
  %v308 = vlaneseq
  %v309 = vand.u32 %v308, 127
  %vm310 = vcmp.lt.s32.totalorder %v309, 127
  %v311 = vsel %vm310, %v305, %v307
  %v312 = vsel %vm310, %v303, %v305
  %v313 = vsel %vm310, %v307, %v303
  %314 = vrot.lane.b32.xlu0 %v299, 126
  %v315 = vpop.permute.xlu0 %314
  %316 = vrot.lane.b32.xlu0 %v300, 126
  %v317 = vpop.permute.xlu0 %316
  %318 = vrot.lane.b32.xlu0 %v301, 126
  %v319 = vpop.permute.xlu0 %318
  %vm320 = vcmp.lt.s32.totalorder %v309, 126
  %v321 = vsel %vm320, %v317, %v319
  %v322 = vsel %vm320, %v315, %v317
  %v323 = vsel %vm320, %v319, %v315
  %324 = vrot.lane.b32.xlu0 %v299, 110
  %v325 = vpop.permute.xlu0 %324
  %326 = vrot.lane.b32.xlu0 %v300, 110
  %v327 = vpop.permute.xlu0 %326
  %328 = vrot.lane.b32.xlu0 %v301, 110
  %v329 = vpop.permute.xlu0 %328
  %vm330 = vcmp.lt.s32.totalorder %v309, 110
  %v331 = vsel %vm330, %v327, %v329
  %v332 = vsel %vm330, %v325, %v327
  %v333 = vsel %vm330, %v329, %v325
  %334 = vrot.lane.b32.xlu0 %v299, 109
  %v335 = vpop.permute.xlu0 %334
  %336 = vrot.lane.b32.xlu0 %v300, 109
  %v337 = vpop.permute.xlu0 %336
  %338 = vrot.lane.b32.xlu0 %v301, 109
  %v339 = vpop.permute.xlu0 %338
  %vm340 = vcmp.lt.s32.totalorder %v309, 109
  %v341 = vsel %vm340, %v337, %v339
  %v342 = vsel %vm340, %v335, %v337
  %v343 = vsel %vm340, %v339, %v335
  %344 = vrot.lane.b32.xlu0 %v299, 108
  %v345 = vpop.permute.xlu0 %344
  %346 = vrot.lane.b32.xlu0 %v300, 108
  %v347 = vpop.permute.xlu0 %346
  %348 = vrot.lane.b32.xlu0 %v301, 108
  %v349 = vpop.permute.xlu0 %348
  %vm350 = vcmp.lt.s32.totalorder %v309, 108
  %v351 = vsel %vm350, %v347, %v349
  %v352 = vsel %vm350, %v345, %v347
  %v353 = vsel %vm350, %v349, %v345
  %354 = vrot.lane.b32.xlu0 %v299, 92
  %v355 = vpop.permute.xlu0 %354
  %356 = vrot.lane.b32.xlu0 %v300, 92
  %v357 = vpop.permute.xlu0 %356
  %358 = vrot.lane.b32.xlu0 %v301, 92
  %v359 = vpop.permute.xlu0 %358
  %vm360 = vcmp.lt.s32.totalorder %v309, 92
  %v361 = vsel %vm360, %v357, %v359
  %v362 = vsel %vm360, %v355, %v357
  %v363 = vsel %vm360, %v359, %v355
  %364 = vrot.lane.b32.xlu0 %v299, 91
  %v365 = vpop.permute.xlu0 %364
  %366 = vrot.lane.b32.xlu0 %v300, 91
  %v367 = vpop.permute.xlu0 %366
  %368 = vrot.lane.b32.xlu0 %v301, 91
  %v369 = vpop.permute.xlu0 %368
  %vm370 = vcmp.lt.s32.totalorder %v309, 91
  %v371 = vsel %vm370, %v367, %v369
  %v372 = vsel %vm370, %v365, %v367
  %v373 = vsel %vm370, %v369, %v365
  %374 = vrot.lane.b32.xlu0 %v299, 90
  %v375 = vpop.permute.xlu0 %374
  %376 = vrot.lane.b32.xlu0 %v300, 90
  %v377 = vpop.permute.xlu0 %376
  %378 = vrot.lane.b32.xlu0 %v301, 90
  %v379 = vpop.permute.xlu0 %378
  %vm380 = vcmp.lt.s32.totalorder %v309, 90
  %v381 = vsel %vm380, %v377, %v379
  %v382 = vsel %vm380, %v375, %v377
  %v383 = vsel %vm380, %v379, %v375
  %385 = vset.pattern.permute.xlu0 120
  %386 = vperm.xlu0 %385, %v38
  %v387 = vpop.permute.xlu0 %386
  %390 = vset.pattern.permute.xlu0 120
  %391 = vperm.xlu0 %390, %v39
  %v392 = vpop.permute.xlu0 %391
  %394 = vrot.lane.b32.xlu0 %v38, 80
  %v395 = vpop.permute.xlu0 %394
  %396 = vrot.lane.b32.xlu0 %v39, 80
  %v397 = vpop.permute.xlu0 %396
  %vm398 = vcmask 588800
  %v399 = vsel %vm398, %v395, 0
  %v401 = vsel %vm398, %v397, 0
  %403 = vmatprep.subr.mxu0 0.0
  %404 = vmatpush1.msra.mxu0 0.0
  %405 = vmatprep.subr.mxu0 0.0
  %406 = vmatpush1.msra.mxu0 0.0
  %407 = vmatprep.subr.mxu0 0.0
  %408 = vmatpush1.msra.mxu0 0.0
  %409 = vmatprep.subr.mxu0 0.0
  %410 = vmatpush1.msra.mxu0 0.0
  %411 = vmatprep.subr.mxu0 0.0
  %412 = vmatpush1.msra.mxu0 0.0
  %413 = vmatprep.subr.mxu0 0.0
  %414 = vmatpush1.msra.mxu0 0.0
  %415 = vmatprep.subr.mxu0 0.0
  %416 = vmatpush1.msra.mxu0 0.0
  %417 = vmatprep.subr.mxu0 %v381
  %418 = vmatpush1.msra.mxu0 %v382
  %419 = vmatprep.subr.mxu0 %v371
  %420 = vmatpush1.msra.mxu0 %v372
  %421 = vmatprep.subr.mxu0 %v361
  %422 = vmatpush1.msra.mxu0 %v362
  %423 = vmatprep.subr.mxu0 %v351
  %424 = vmatpush1.msra.mxu0 %v352
  %425 = vmatprep.subr.mxu0 %v341
  %426 = vmatpush1.msra.mxu0 %v342
  %427 = vmatprep.subr.mxu0 %v331
  %428 = vmatpush1.msra.mxu0 %v332
  %429 = vmatprep.subr.mxu0 %v321
  %430 = vmatpush1.msra.mxu0 %v322
  %431 = vmatprep.subr.mxu0 %v311
  %432 = vmatpush1.msra.mxu0 %v312
  %433 = vmatprep.subr.mxu0 %v300
  %434 = vmatpush1.msra.mxu0 %v299
  %435 = vmatprep.subr.mxu0 0.0
  %436 = vmatpush2.msra.mxu0 0.0
  %437 = vmatprep.subr.mxu0 0.0
  %438 = vmatpush2.msra.mxu0 0.0
  %439 = vmatprep.subr.mxu0 0.0
  %440 = vmatpush2.msra.mxu0 0.0
  %441 = vmatprep.subr.mxu0 0.0
  %442 = vmatpush2.msra.mxu0 0.0
  %443 = vmatprep.subr.mxu0 0.0
  %444 = vmatpush2.msra.mxu0 0.0
  %445 = vmatprep.subr.mxu0 0.0
  %446 = vmatpush2.msra.mxu0 0.0
  %447 = vmatprep.subr.mxu0 0.0
  %448 = vmatpush2.msra.mxu0 0.0
  %449 = vmatprep.subr.mxu0 0.0
  %450 = vmatpush2.msra.mxu0 0.0
  %451 = vmatprep.subr.mxu0 0.0
  %452 = vmatpush2.msra.mxu0 0.0
  %453 = vmatprep.subr.mxu0 0.0
  %454 = vmatpush2.msra.mxu0 0.0
  %455 = vmatprep.subr.mxu0 0.0
  %456 = vmatpush2.msra.mxu0 0.0
  %457 = vmatprep.subr.mxu0 0.0
  %458 = vmatpush2.msra.mxu0 0.0
  %459 = vmatprep.subr.mxu0 0.0
  %460 = vmatpush2.msra.mxu0 0.0
  %461 = vmatprep.subr.mxu0 0.0
  %462 = vmatpush2.msra.mxu0 0.0
  %463 = vmatprep.subr.mxu0 0.0
  %464 = vmatpush2.msra.mxu0 0.0
  %465 = vmatprep.subr.mxu0 0.0
  %466 = vmatpush2.msra.mxu0 0.0
  %467 = vmatprep.mubr.f32.mxu0 0.0
  %468 = vmatmul.mubr.f32.gmra.mxu0 %v399
  %v469 = vpop.f32.mrf.mxu0
  %v470 = vadd.f32 %v387, %v469
  %v471 = vpop.f32.mrf.mxu0
  %v472 = vadd.f32 %v387, %v471
  %473 = vmatprep.mubr.f32.mxu0 0.0
  %474 = vmatmul.mubr.f32.gmra.mxu0 %v401
  %v475 = vpop.f32.mrf.mxu0
  %v476 = vadd.f32 %v392, %v475
  %v477 = vpop.f32.mrf.mxu0
  %v478 = vadd.f32 %v392, %v477
  %479 = vdwg.mxu0
  %480 = vmatprep.subr.mxu0 0.0
  %481 = vmatpush1.msra.mxu0 0.0
  %482 = vmatprep.subr.mxu0 0.0
  %483 = vmatpush1.msra.mxu0 0.0
  %484 = vmatprep.subr.mxu0 0.0
  %485 = vmatpush1.msra.mxu0 0.0
  %486 = vmatprep.subr.mxu0 0.0
  %487 = vmatpush1.msra.mxu0 0.0
  %488 = vmatprep.subr.mxu0 0.0
  %489 = vmatpush1.msra.mxu0 0.0
  %490 = vmatprep.subr.mxu0 0.0
  %491 = vmatpush1.msra.mxu0 0.0
  %492 = vmatprep.subr.mxu0 0.0
  %493 = vmatpush1.msra.mxu0 0.0
  %494 = vmatprep.subr.mxu0 0.0
  %495 = vmatpush1.msra.mxu0 %v383
  %496 = vmatprep.subr.mxu0 0.0
  %497 = vmatpush1.msra.mxu0 %v373
  %498 = vmatprep.subr.mxu0 0.0
  %499 = vmatpush1.msra.mxu0 %v363
  %500 = vmatprep.subr.mxu0 0.0
  %501 = vmatpush1.msra.mxu0 %v353
  %502 = vmatprep.subr.mxu0 0.0
  %503 = vmatpush1.msra.mxu0 %v343
  %504 = vmatprep.subr.mxu0 0.0
  %505 = vmatpush1.msra.mxu0 %v333
  %506 = vmatprep.subr.mxu0 0.0
  %507 = vmatpush1.msra.mxu0 %v323
  %508 = vmatprep.subr.mxu0 0.0
  %509 = vmatpush1.msra.mxu0 %v313
  %510 = vmatprep.subr.mxu0 0.0
  %511 = vmatpush1.msra.mxu0 %v301
  %512 = vmatprep.subr.mxu0 0.0
  %513 = vmatpush2.msra.mxu0 0.0
  %514 = vmatprep.subr.mxu0 0.0
  %515 = vmatpush2.msra.mxu0 0.0
  %516 = vmatprep.subr.mxu0 0.0
  %517 = vmatpush2.msra.mxu0 0.0
  %518 = vmatprep.subr.mxu0 0.0
  %519 = vmatpush2.msra.mxu0 0.0
  %520 = vmatprep.subr.mxu0 0.0
  %521 = vmatpush2.msra.mxu0 0.0
  %522 = vmatprep.subr.mxu0 0.0
  %523 = vmatpush2.msra.mxu0 0.0
  %524 = vmatprep.subr.mxu0 0.0
  %525 = vmatpush2.msra.mxu0 0.0
  %526 = vmatprep.subr.mxu0 0.0
  %527 = vmatpush2.msra.mxu0 0.0
  %528 = vmatprep.subr.mxu0 0.0
  %529 = vmatpush2.msra.mxu0 0.0
  %530 = vmatprep.subr.mxu0 0.0
  %531 = vmatpush2.msra.mxu0 0.0
  %532 = vmatprep.subr.mxu0 0.0
  %533 = vmatpush2.msra.mxu0 0.0
  %534 = vmatprep.subr.mxu0 0.0
  %535 = vmatpush2.msra.mxu0 0.0
  %536 = vmatprep.subr.mxu0 0.0
  %537 = vmatpush2.msra.mxu0 0.0
  %538 = vmatprep.subr.mxu0 0.0
  %539 = vmatpush2.msra.mxu0 0.0
  %540 = vmatprep.subr.mxu0 0.0
  %541 = vmatpush2.msra.mxu0 0.0
  %542 = vmatprep.subr.mxu0 0.0
  %543 = vmatpush2.msra.mxu0 0.0
  %544 = vmatprep.mubr.f32.mxu0 0.0
  %545 = vmatmul.mubr.f32.gmra.mxu0 %v399
  %v546 = vpop.f32.mrf.mxu0
  %v547 = vadd.f32 %v387, %v546
  %v548 = vpop.f32.mrf.mxu0
  %549 = vmatprep.mubr.f32.mxu0 0.0
  %550 = vmatmul.mubr.f32.gmra.mxu0 %v401
  %v551 = vpop.f32.mrf.mxu0
  %v552 = vadd.f32 %v392, %v551
  %v553 = vpop.f32.mrf.mxu0
  %554 = vdwg.mxu0
  %v555 = vmax.f32 %v470, 0.0
  %v556 = vmax.f32 %v472, 0.0
  %v557 = vmax.f32 %v547, 0.0
  %v558 = vmax.f32 %v476, 0.0
  %v559 = vmax.f32 %v478, 0.0
  %v560 = vmax.f32 %v552, 0.0
  %561 = vrot.lane.b32.xlu0 %v555, 110
  %v562 = vpop.permute.xlu0 %561
  %563 = vrot.lane.b32.xlu0 %v558, 110
  %v564 = vpop.permute.xlu0 %563
  %565 = vrot.lane.b32.xlu0 %v556, 110
  %v566 = vpop.permute.xlu0 %565
  %567 = vrot.lane.b32.xlu0 %v559, 110
  %v568 = vpop.permute.xlu0 %567
  %569 = vrot.lane.b32.xlu0 %v557, 110
  %v570 = vpop.permute.xlu0 %569
  %571 = vrot.lane.b32.xlu0 %v560, 110
  %v572 = vpop.permute.xlu0 %571
  %v573 = vsel %vm330, %v566, %v570
  %v574 = vsel %vm330, %v568, %v572
  %v575 = vsel %vm330, %v562, %v566
  %v576 = vsel %vm330, %v564, %v568
  %v577 = vsel %vm330, %v570, %v562
  %v578 = vsel %vm330, %v572, %v564
  %v579 = vmax.f32 %v555, %v575
  %v580 = vmax.f32 %v556, %v573
  %v581 = vmax.f32 %v557, %v577
  %v582 = vmax.f32 %v558, %v576
  %v583 = vmax.f32 %v559, %v574
  %v584 = vmax.f32 %v560, %v578
  %585 = vrot.lane.b32.xlu0 %v579, 127
  %v586 = vpop.permute.xlu0 %585
  %587 = vrot.lane.b32.xlu0 %v582, 127
  %v588 = vpop.permute.xlu0 %587
  %589 = vrot.lane.b32.xlu0 %v580, 127
  %v590 = vpop.permute.xlu0 %589
  %591 = vrot.lane.b32.xlu0 %v583, 127
  %v592 = vpop.permute.xlu0 %591
  %593 = vrot.lane.b32.xlu0 %v581, 127
  %v594 = vpop.permute.xlu0 %593
  %595 = vrot.lane.b32.xlu0 %v584, 127
  %v596 = vpop.permute.xlu0 %595
  %v597 = vsel %vm310, %v590, %v594
  %v598 = vsel %vm310, %v592, %v596
  %v599 = vsel %vm310, %v586, %v590
  %v600 = vsel %vm310, %v588, %v592
  %v601 = vsel %vm310, %v594, %v586
  %v602 = vsel %vm310, %v596, %v588
  %v603 = vmax.f32 %v579, %v599
  %v604 = vmax.f32 %v580, %v597
  %v605 = vmax.f32 %v581, %v601
  %v606 = vmax.f32 %v582, %v600
  %v607 = vmax.f32 %v583, %v598
  %v608 = vmax.f32 %v584, %v602
  %609 = vmatprep.subr.mxu0 0.0
  %610 = vmatpush1.msra.mxu0 %v214
  %611 = vmatprep.subr.mxu0 0.0
  %612 = vmatpush1.msra.mxu0 %v213
  %613 = vmatprep.subr.mxu0 0.0
  %614 = vmatpush1.msra.mxu0 %v212
  %615 = vmatprep.subr.mxu0 0.0
  %616 = vmatpush1.msra.mxu0 %v211
  %617 = vmatprep.subr.mxu0 0.0
  %618 = vmatpush1.msra.mxu0 %v210
  %619 = vmatprep.subr.mxu0 0.0
  %620 = vmatpush1.msra.mxu0 %v209
  %621 = vmatprep.subr.mxu0 0.0
  %622 = vmatpush1.msra.mxu0 %v208
  %623 = vmatprep.subr.mxu0 0.0
  %624 = vmatpush1.msra.mxu0 %v207
  %625 = vmatprep.subr.mxu0 0.0
  %626 = vmatpush1.msra.mxu0 %v206
  %627 = vmatprep.subr.mxu0 0.0
  %628 = vmatpush1.msra.mxu0 %v205
  %629 = vmatprep.subr.mxu0 0.0
  %630 = vmatpush1.msra.mxu0 %v204
  %631 = vmatprep.subr.mxu0 0.0
  %632 = vmatpush1.msra.mxu0 %v203
  %633 = vmatprep.subr.mxu0 0.0
  %634 = vmatpush1.msra.mxu0 %v202
  %635 = vmatprep.subr.mxu0 0.0
  %636 = vmatpush1.msra.mxu0 %v201
  %637 = vmatprep.subr.mxu0 0.0
  %638 = vmatpush1.msra.mxu0 %v200
  %639 = vmatprep.subr.mxu0 0.0
  %640 = vmatpush1.msra.mxu0 %v199
  %641 = vmatprep.subr.mxu0 0.0
  %642 = vmatpush2.msra.mxu0 %v230
  %643 = vmatprep.subr.mxu0 0.0
  %644 = vmatpush2.msra.mxu0 %v229
  %645 = vmatprep.subr.mxu0 0.0
  %646 = vmatpush2.msra.mxu0 %v228
  %647 = vmatprep.subr.mxu0 0.0
  %648 = vmatpush2.msra.mxu0 %v227
  %649 = vmatprep.subr.mxu0 0.0
  %650 = vmatpush2.msra.mxu0 %v226
  %651 = vmatprep.subr.mxu0 0.0
  %652 = vmatpush2.msra.mxu0 %v225
  %653 = vmatprep.subr.mxu0 0.0
  %654 = vmatpush2.msra.mxu0 %v224
  %655 = vmatprep.subr.mxu0 0.0
  %656 = vmatpush2.msra.mxu0 %v223
  %657 = vmatprep.subr.mxu0 0.0
  %658 = vmatpush2.msra.mxu0 %v222
  %659 = vmatprep.subr.mxu0 0.0
  %660 = vmatpush2.msra.mxu0 %v221
  %661 = vmatprep.subr.mxu0 0.0
  %662 = vmatpush2.msra.mxu0 %v220
  %663 = vmatprep.subr.mxu0 0.0
  %664 = vmatpush2.msra.mxu0 %v219
  %665 = vmatprep.subr.mxu0 0.0
  %666 = vmatpush2.msra.mxu0 %v218
  %667 = vmatprep.subr.mxu0 0.0
  %668 = vmatpush2.msra.mxu0 %v217
  %669 = vmatprep.subr.mxu0 0.0
  %670 = vmatpush2.msra.mxu0 %v216
  %671 = vmatprep.subr.mxu0 0.0
  %672 = vmatpush2.msra.mxu0 %v215
  %673 = vmatprep.mubr.f32.mxu0 %v604
  %674 = vmatmul.mubr.f32.gmra.mxu0 %v603
  %v675 = vpop.f32.mrf.mxu0
  %v676 = vadd.f32 0.0, %v675
  %v677 = vpop.f32.mrf.mxu0
  %678 = vmatprep.mubr.f32.mxu0 %v607
  %679 = vmatmul.mubr.f32.gmra.mxu0 %v606
  %v680 = vpop.f32.mrf.mxu0
  %v681 = vadd.f32 0.0, %v680
  %v682 = vpop.f32.mrf.mxu0
  %683 = vdwg.mxu0
  %684 = vmatprep.subr.mxu0 0.0
  %685 = vmatpush1.msra.mxu0 %v246
  %686 = vmatprep.subr.mxu0 0.0
  %687 = vmatpush1.msra.mxu0 %v245
  %688 = vmatprep.subr.mxu0 0.0
  %689 = vmatpush1.msra.mxu0 %v244
  %690 = vmatprep.subr.mxu0 0.0
  %691 = vmatpush1.msra.mxu0 %v243
  %692 = vmatprep.subr.mxu0 0.0
  %693 = vmatpush1.msra.mxu0 %v242
  %694 = vmatprep.subr.mxu0 0.0
  %695 = vmatpush1.msra.mxu0 %v241
  %696 = vmatprep.subr.mxu0 0.0
  %697 = vmatpush1.msra.mxu0 %v240
  %698 = vmatprep.subr.mxu0 0.0
  %699 = vmatpush1.msra.mxu0 %v239
  %700 = vmatprep.subr.mxu0 0.0
  %701 = vmatpush1.msra.mxu0 %v238
  %702 = vmatprep.subr.mxu0 0.0
  %703 = vmatpush1.msra.mxu0 %v237
  %704 = vmatprep.subr.mxu0 0.0
  %705 = vmatpush1.msra.mxu0 %v236
  %706 = vmatprep.subr.mxu0 0.0
  %707 = vmatpush1.msra.mxu0 %v235
  %708 = vmatprep.subr.mxu0 0.0
  %709 = vmatpush1.msra.mxu0 %v234
  %710 = vmatprep.subr.mxu0 0.0
  %711 = vmatpush1.msra.mxu0 %v233
  %712 = vmatprep.subr.mxu0 0.0
  %713 = vmatpush1.msra.mxu0 %v232
  %714 = vmatprep.subr.mxu0 0.0
  %715 = vmatpush1.msra.mxu0 %v231
  %716 = vmatprep.subr.mxu0 0.0
  %717 = vmatpush2.msra.mxu0 0.0
  %718 = vmatprep.subr.mxu0 0.0
  %719 = vmatpush2.msra.mxu0 0.0
  %720 = vmatprep.subr.mxu0 0.0
  %721 = vmatpush2.msra.mxu0 0.0
  %722 = vmatprep.subr.mxu0 0.0
  %723 = vmatpush2.msra.mxu0 0.0
  %724 = vmatprep.subr.mxu0 0.0
  %725 = vmatpush2.msra.mxu0 0.0
  %726 = vmatprep.subr.mxu0 0.0
  %727 = vmatpush2.msra.mxu0 0.0
  %728 = vmatprep.subr.mxu0 0.0
  %729 = vmatpush2.msra.mxu0 0.0
  %730 = vmatprep.subr.mxu0 0.0
  %731 = vmatpush2.msra.mxu0 0.0
  %732 = vmatprep.subr.mxu0 0.0
  %733 = vmatpush2.msra.mxu0 0.0
  %734 = vmatprep.subr.mxu0 0.0
  %735 = vmatpush2.msra.mxu0 0.0
  %736 = vmatprep.subr.mxu0 0.0
  %737 = vmatpush2.msra.mxu0 0.0
  %738 = vmatprep.subr.mxu0 0.0
  %739 = vmatpush2.msra.mxu0 0.0
  %740 = vmatprep.subr.mxu0 0.0
  %741 = vmatpush2.msra.mxu0 0.0
  %742 = vmatprep.subr.mxu0 0.0
  %743 = vmatpush2.msra.mxu0 0.0
  %744 = vmatprep.subr.mxu0 0.0
  %745 = vmatpush2.msra.mxu0 0.0
  %746 = vmatprep.subr.mxu0 0.0
  %747 = vmatpush2.msra.mxu0 0.0
  %748 = vmatprep.mubr.f32.mxu0 0.0
  %749 = vmatmul.mubr.f32.gmra.mxu0 %v605
  %v750 = vpop.f32.mrf.mxu0
  %v751 = vadd.f32 %v676, %v750
  %v752 = vpop.f32.mrf.mxu0
  %753 = vmatprep.mubr.f32.mxu0 0.0
  %754 = vmatmul.mubr.f32.gmra.mxu0 %v608
  %v755 = vpop.f32.mrf.mxu0
  %v756 = vadd.f32 %v681, %v755
  %v757 = vpop.f32.mrf.mxu0
  %758 = vdwg.mxu0
  %759 = vrot.lane.b32.xlu0 %v751, 127
  %v760 = vpop.permute.xlu0 %759
  %761 = vrot.lane.b32.xlu0 %v756, 127
  %v762 = vpop.permute.xlu0 %761
  %763 = vrot.lane.b32.xlu0 %v751, 126
  %v764 = vpop.permute.xlu0 %763
  %765 = vrot.lane.b32.xlu0 %v756, 126
  %v766 = vpop.permute.xlu0 %765
  %767 = vrot.lane.b32.xlu0 %v751, 118
  %v768 = vpop.permute.xlu0 %767
  %769 = vrot.lane.b32.xlu0 %v756, 118
  %v770 = vpop.permute.xlu0 %769
  %771 = vrot.lane.b32.xlu0 %v751, 117
  %v772 = vpop.permute.xlu0 %771
  %773 = vrot.lane.b32.xlu0 %v756, 117
  %v774 = vpop.permute.xlu0 %773
  %775 = vrot.lane.b32.xlu0 %v751, 116
  %v776 = vpop.permute.xlu0 %775
  %777 = vrot.lane.b32.xlu0 %v756, 116
  %v778 = vpop.permute.xlu0 %777
  %779 = vrot.lane.b32.xlu0 %v751, 108
  %v780 = vpop.permute.xlu0 %779
  %781 = vrot.lane.b32.xlu0 %v756, 108
  %v782 = vpop.permute.xlu0 %781
  %783 = vrot.lane.b32.xlu0 %v751, 107
  %v784 = vpop.permute.xlu0 %783
  %785 = vrot.lane.b32.xlu0 %v756, 107
  %v786 = vpop.permute.xlu0 %785
  %787 = vrot.lane.b32.xlu0 %v751, 106
  %v788 = vpop.permute.xlu0 %787
  %789 = vrot.lane.b32.xlu0 %v756, 106
  %v790 = vpop.permute.xlu0 %789
  %791 = vset.pattern.permute.xlu0 121
  %792 = vperm.xlu0 %791, %v38
  %v793 = vpop.permute.xlu0 %792
  %795 = vset.pattern.permute.xlu0 121
  %796 = vperm.xlu0 %795, %v39
  %v797 = vpop.permute.xlu0 %796
  %800 = vset.pattern.permute.xlu0 121
  %801 = vperm.xlu0 %800, %v40
  %v802 = vpop.permute.xlu0 %801
  %805 = vset.pattern.permute.xlu0 121
  %806 = vperm.xlu0 %805, %v41
  %v807 = vpop.permute.xlu0 %806
  %813 = vrot.lane.b32.xlu0 %v16, 96
  %v814 = vpop.permute.xlu0 %813
  %815 = vrot.lane.b32.xlu0 %v38, 96
  %v816 = vpop.permute.xlu0 %815
  %817 = vrot.lane.b32.xlu0 %v19, 96
  %v818 = vpop.permute.xlu0 %817
  %819 = vrot.lane.b32.xlu0 %v39, 96
  %v820 = vpop.permute.xlu0 %819
  %821 = vrot.lane.b32.xlu0 %v22, 96
  %v822 = vpop.permute.xlu0 %821
  %823 = vrot.lane.b32.xlu0 %v40, 96
  %v824 = vpop.permute.xlu0 %823
  %825 = vrot.lane.b32.xlu0 %v25, 96
  %v826 = vpop.permute.xlu0 %825
  %827 = vrot.lane.b32.xlu0 %v41, 96
  %v828 = vpop.permute.xlu0 %827
  %vm829 = vcmask 785408
  %v830 = vsel %vm829, %v814, %v816
  %v831 = vsel %vm829, %v818, %v820
  %v832 = vsel %vm829, %v822, %v824
  %v833 = vsel %vm829, %v826, %v828
  %vm838 = vcmask 130048
  %v839 = vsel %vm838, %v816, 0
  %v841 = vsel %vm838, %v820, 0
  %v843 = vsel %vm838, %v824, 0
  %v845 = vsel %vm838, %v828, 0
  %847 = vmatprep.subr.mxu0 0.0
  %848 = vmatpush1.msra.mxu0 %v786
  %849 = vmatprep.subr.mxu0 0.0
  %850 = vmatpush1.msra.mxu0 %v784
  %851 = vmatprep.subr.mxu0 0.0
  %852 = vmatpush1.msra.mxu0 %v782
  %853 = vmatprep.subr.mxu0 0.0
  %854 = vmatpush1.msra.mxu0 %v780
  %855 = vmatprep.subr.mxu0 0.0
  %856 = vmatpush1.msra.mxu0 %v778
  %857 = vmatprep.subr.mxu0 0.0
  %858 = vmatpush1.msra.mxu0 %v776
  %859 = vmatprep.subr.mxu0 0.0
  %860 = vmatpush1.msra.mxu0 %v774
  %861 = vmatprep.subr.mxu0 0.0
  %862 = vmatpush1.msra.mxu0 %v772
  %863 = vmatprep.subr.mxu0 0.0
  %864 = vmatpush1.msra.mxu0 %v770
  %865 = vmatprep.subr.mxu0 0.0
  %866 = vmatpush1.msra.mxu0 %v768
  %867 = vmatprep.subr.mxu0 0.0
  %868 = vmatpush1.msra.mxu0 %v766
  %869 = vmatprep.subr.mxu0 0.0
  %870 = vmatpush1.msra.mxu0 %v764
  %871 = vmatprep.subr.mxu0 0.0
  %872 = vmatpush1.msra.mxu0 %v762
  %873 = vmatprep.subr.mxu0 0.0
  %874 = vmatpush1.msra.mxu0 %v760
  %875 = vmatprep.subr.mxu0 0.0
  %876 = vmatpush1.msra.mxu0 %v756
  %877 = vmatprep.subr.mxu0 0.0
  %878 = vmatpush1.msra.mxu0 %v751
  %879 = vmatprep.subr.mxu0 0.0
  %880 = vmatpush2.msra.mxu0 0.0
  %881 = vmatprep.subr.mxu0 0.0
  %882 = vmatpush2.msra.mxu0 0.0
  %883 = vmatprep.subr.mxu0 0.0
  %884 = vmatpush2.msra.mxu0 0.0
  %885 = vmatprep.subr.mxu0 0.0
  %886 = vmatpush2.msra.mxu0 0.0
  %887 = vmatprep.subr.mxu0 0.0
  %888 = vmatpush2.msra.mxu0 0.0
  %889 = vmatprep.subr.mxu0 0.0
  %890 = vmatpush2.msra.mxu0 0.0
  %891 = vmatprep.subr.mxu0 0.0
  %892 = vmatpush2.msra.mxu0 0.0
  %893 = vmatprep.subr.mxu0 0.0
  %894 = vmatpush2.msra.mxu0 0.0
  %895 = vmatprep.subr.mxu0 0.0
  %896 = vmatpush2.msra.mxu0 0.0
  %897 = vmatprep.subr.mxu0 0.0
  %898 = vmatpush2.msra.mxu0 0.0
  %899 = vmatprep.subr.mxu0 0.0
  %900 = vmatpush2.msra.mxu0 0.0
  %901 = vmatprep.subr.mxu0 0.0
  %902 = vmatpush2.msra.mxu0 0.0
  %903 = vmatprep.subr.mxu0 0.0
  %904 = vmatpush2.msra.mxu0 0.0
  %905 = vmatprep.subr.mxu0 0.0
  %906 = vmatpush2.msra.mxu0 0.0
  %907 = vmatprep.subr.mxu0 0.0
  %908 = vmatpush2.msra.mxu0 %v790
  %909 = vmatprep.subr.mxu0 0.0
  %910 = vmatpush2.msra.mxu0 %v788
  %911 = vmatprep.mubr.f32.mxu0 %v839
  %912 = vmatmul.mubr.f32.gmra.mxu0 %v830
  %v913 = vpop.f32.mrf.mxu0
  %v914 = vadd.f32 %v793, %v913
  %v915 = vpop.f32.mrf.mxu0
  %916 = vmatprep.mubr.f32.mxu0 %v841
  %917 = vmatmul.mubr.f32.gmra.mxu0 %v831
  %v918 = vpop.f32.mrf.mxu0
  %v919 = vadd.f32 %v797, %v918
  %v920 = vpop.f32.mrf.mxu0
  %921 = vmatprep.mubr.f32.mxu0 %v843
  %922 = vmatmul.mubr.f32.gmra.mxu0 %v832
  %v923 = vpop.f32.mrf.mxu0
  %v924 = vadd.f32 %v802, %v923
  %v925 = vpop.f32.mrf.mxu0
  %926 = vmatprep.mubr.f32.mxu0 %v845
  %927 = vmatmul.mubr.f32.gmra.mxu0 %v833
  %v928 = vpop.f32.mrf.mxu0
  %v929 = vadd.f32 %v807, %v928
  %v930 = vpop.f32.mrf.mxu0
  %931 = vdwg.mxu0
  %v932 = vmax.f32 %v914, 0.0
  %v933 = vmax.f32 %v919, 0.0
  %v934 = vmax.f32 %v924, 0.0
  %v935 = vmax.f32 %v929, 0.0
  %936 = vrot.lane.b32.xlu0 %v932, 118
  %v937 = vpop.permute.xlu0 %936
  %938 = vrot.lane.b32.xlu0 %v933, 118
  %v939 = vpop.permute.xlu0 %938
  %940 = vrot.lane.b32.xlu0 %v934, 118
  %v941 = vpop.permute.xlu0 %940
  %942 = vrot.lane.b32.xlu0 %v935, 118
  %v943 = vpop.permute.xlu0 %942
  %v944 = vmax.f32 %v932, %v937
  %v945 = vmax.f32 %v933, %v939
  %v946 = vmax.f32 %v934, %v941
  %v947 = vmax.f32 %v935, %v943
  %948 = vrot.lane.b32.xlu0 %v944, 127
  %v949 = vpop.permute.xlu0 %948
  %950 = vrot.lane.b32.xlu0 %v945, 127
  %v951 = vpop.permute.xlu0 %950
  %952 = vrot.lane.b32.xlu0 %v946, 127
  %v953 = vpop.permute.xlu0 %952
  %954 = vrot.lane.b32.xlu0 %v947, 127
  %v955 = vpop.permute.xlu0 %954
  %v956 = vmax.f32 %v944, %v949
  %v957 = vmax.f32 %v945, %v951
  %v958 = vmax.f32 %v946, %v953
  %v959 = vmax.f32 %v947, %v955
  %960 = vmatprep.subr.mxu0 0.0
  %961 = vmatpush1.msra.mxu0 %v298
  %962 = vmatprep.subr.mxu0 0.0
  %963 = vmatpush1.msra.mxu0 %v297
  %964 = vmatprep.subr.mxu0 0.0
  %965 = vmatpush1.msra.mxu0 %v296
  %966 = vmatprep.subr.mxu0 0.0
  %967 = vmatpush1.msra.mxu0 %v295
  %968 = vmatprep.subr.mxu0 0.0
  %969 = vmatpush1.msra.mxu0 %v294
  %970 = vmatprep.subr.mxu0 0.0
  %971 = vmatpush1.msra.mxu0 %v293
  %972 = vmatprep.subr.mxu0 0.0
  %973 = vmatpush1.msra.mxu0 %v292
  %974 = vmatprep.subr.mxu0 0.0
  %975 = vmatpush1.msra.mxu0 %v291
  %976 = vmatprep.subr.mxu0 0.0
  %977 = vmatpush1.msra.mxu0 %v290
  %978 = vmatprep.subr.mxu0 0.0
  %979 = vmatpush1.msra.mxu0 %v289
  %980 = vmatprep.subr.mxu0 0.0
  %981 = vmatpush1.msra.mxu0 %v288
  %982 = vmatprep.subr.mxu0 0.0
  %983 = vmatpush1.msra.mxu0 %v287
  %984 = vmatprep.subr.mxu0 0.0
  %985 = vmatpush1.msra.mxu0 %v286
  %986 = vmatprep.subr.mxu0 0.0
  %987 = vmatpush1.msra.mxu0 %v285
  %988 = vmatprep.subr.mxu0 0.0
  %989 = vmatpush1.msra.mxu0 %v284
  %990 = vmatprep.subr.mxu0 0.0
  %991 = vmatpush1.msra.mxu0 %v283
  %992 = vmatprep.subr.mxu0 0.0
  %993 = vmatpush2.msra.mxu0 0.0
  %994 = vmatprep.subr.mxu0 0.0
  %995 = vmatpush2.msra.mxu0 0.0
  %996 = vmatprep.subr.mxu0 0.0
  %997 = vmatpush2.msra.mxu0 0.0
  %998 = vmatprep.subr.mxu0 0.0
  %999 = vmatpush2.msra.mxu0 0.0
  %1000 = vmatprep.subr.mxu0 0.0
  %1001 = vmatpush2.msra.mxu0 0.0
  %1002 = vmatprep.subr.mxu0 0.0
  %1003 = vmatpush2.msra.mxu0 0.0
  %1004 = vmatprep.subr.mxu0 0.0
  %1005 = vmatpush2.msra.mxu0 0.0
  %1006 = vmatprep.subr.mxu0 0.0
  %1007 = vmatpush2.msra.mxu0 0.0
  %1008 = vmatprep.subr.mxu0 0.0
  %1009 = vmatpush2.msra.mxu0 0.0
  %1010 = vmatprep.subr.mxu0 0.0
  %1011 = vmatpush2.msra.mxu0 0.0
  %1012 = vmatprep.subr.mxu0 0.0
  %1013 = vmatpush2.msra.mxu0 0.0
  %1014 = vmatprep.subr.mxu0 0.0
  %1015 = vmatpush2.msra.mxu0 0.0
  %1016 = vmatprep.subr.mxu0 0.0
  %1017 = vmatpush2.msra.mxu0 0.0
  %1018 = vmatprep.subr.mxu0 0.0
  %1019 = vmatpush2.msra.mxu0 0.0
  %1020 = vmatprep.subr.mxu0 0.0
  %1021 = vmatpush2.msra.mxu0 0.0
  %1022 = vmatprep.subr.mxu0 0.0
  %1023 = vmatpush2.msra.mxu0 0.0
  %1024 = vmatprep.mubr.f32.mxu0 0.0
  %1025 = vmatmul.mubr.f32.gmra.mxu0 %v956
  %v1026 = vpop.f32.mrf.mxu0
  %v1027 = vadd.f32 0.0, %v1026
  %v1028 = vpop.f32.mrf.mxu0
  %1029 = vmatprep.mubr.f32.mxu0 0.0
  %1030 = vmatmul.mubr.f32.gmra.mxu0 %v957
  %v1031 = vpop.f32.mrf.mxu0
  %v1032 = vadd.f32 0.0, %v1031
  %v1033 = vpop.f32.mrf.mxu0
  %1034 = vmatprep.mubr.f32.mxu0 0.0
  %1035 = vmatmul.mubr.f32.gmra.mxu0 %v958
  %v1036 = vpop.f32.mrf.mxu0
  %v1037 = vadd.f32 0.0, %v1036
  %v1038 = vpop.f32.mrf.mxu0
  %1039 = vmatprep.mubr.f32.mxu0 0.0
  %1040 = vmatmul.mubr.f32.gmra.mxu0 %v959
  %v1041 = vpop.f32.mrf.mxu0
  %v1042 = vadd.f32 0.0, %v1041
  %v1043 = vpop.f32.mrf.mxu0
  %1044 = vdwg.mxu0
  %1045 = vrot.lane.b32.xlu0 %v1027, 127
  %v1046 = vpop.permute.xlu0 %1045
  %1047 = vrot.lane.b32.xlu0 %v1032, 127
  %v1048 = vpop.permute.xlu0 %1047
  %1049 = vrot.lane.b32.xlu0 %v1037, 127
  %v1050 = vpop.permute.xlu0 %1049
  %1051 = vrot.lane.b32.xlu0 %v1042, 127
  %v1052 = vpop.permute.xlu0 %1051
  %1053 = vrot.lane.b32.xlu0 %v1027, 126
  %v1054 = vpop.permute.xlu0 %1053
  %1055 = vrot.lane.b32.xlu0 %v1032, 126
  %v1056 = vpop.permute.xlu0 %1055
  %1057 = vrot.lane.b32.xlu0 %v1037, 126
  %v1058 = vpop.permute.xlu0 %1057
  %1059 = vrot.lane.b32.xlu0 %v1042, 126
  %v1060 = vpop.permute.xlu0 %1059
  %1061 = vrot.lane.b32.xlu0 %v1027, 122
  %v1062 = vpop.permute.xlu0 %1061
  %1063 = vrot.lane.b32.xlu0 %v1032, 122
  %v1064 = vpop.permute.xlu0 %1063
  %1065 = vrot.lane.b32.xlu0 %v1037, 122
  %v1066 = vpop.permute.xlu0 %1065
  %1067 = vrot.lane.b32.xlu0 %v1042, 122
  %v1068 = vpop.permute.xlu0 %1067
  %1069 = vrot.lane.b32.xlu0 %v1027, 121
  %v1070 = vpop.permute.xlu0 %1069
  %1071 = vrot.lane.b32.xlu0 %v1032, 121
  %v1072 = vpop.permute.xlu0 %1071
  %1073 = vrot.lane.b32.xlu0 %v1037, 121
  %v1074 = vpop.permute.xlu0 %1073
  %1075 = vrot.lane.b32.xlu0 %v1042, 121
  %v1076 = vpop.permute.xlu0 %1075
  %1077 = vrot.lane.b32.xlu0 %v1027, 120
  %v1078 = vpop.permute.xlu0 %1077
  %1079 = vrot.lane.b32.xlu0 %v1032, 120
  %v1080 = vpop.permute.xlu0 %1079
  %1081 = vrot.lane.b32.xlu0 %v1037, 120
  %v1082 = vpop.permute.xlu0 %1081
  %1083 = vrot.lane.b32.xlu0 %v1042, 120
  %v1084 = vpop.permute.xlu0 %1083
  %1085 = vrot.lane.b32.xlu0 %v1027, 116
  %v1086 = vpop.permute.xlu0 %1085
  %1087 = vrot.lane.b32.xlu0 %v1032, 116
  %v1088 = vpop.permute.xlu0 %1087
  %1089 = vrot.lane.b32.xlu0 %v1037, 116
  %v1090 = vpop.permute.xlu0 %1089
  %1091 = vrot.lane.b32.xlu0 %v1042, 116
  %v1092 = vpop.permute.xlu0 %1091
  %1093 = vrot.lane.b32.xlu0 %v1027, 115
  %v1094 = vpop.permute.xlu0 %1093
  %1095 = vrot.lane.b32.xlu0 %v1032, 115
  %v1096 = vpop.permute.xlu0 %1095
  %1097 = vrot.lane.b32.xlu0 %v1037, 115
  %v1098 = vpop.permute.xlu0 %1097
  %1099 = vrot.lane.b32.xlu0 %v1042, 115
  %v1100 = vpop.permute.xlu0 %1099
  %1101 = vrot.lane.b32.xlu0 %v1027, 114
  %v1102 = vpop.permute.xlu0 %1101
  %1103 = vrot.lane.b32.xlu0 %v1032, 114
  %v1104 = vpop.permute.xlu0 %1103
  %1105 = vrot.lane.b32.xlu0 %v1037, 114
  %v1106 = vpop.permute.xlu0 %1105
  %1107 = vrot.lane.b32.xlu0 %v1042, 114
  %v1108 = vpop.permute.xlu0 %1107
  %1109 = vset.pattern.permute.xlu0 122
  %1110 = vperm.xlu0 %1109, %v38
  %v1111 = vpop.permute.xlu0 %1110
  %1113 = vset.pattern.permute.xlu0 122
  %1114 = vperm.xlu0 %1113, %v39
  %v1115 = vpop.permute.xlu0 %1114
  %1117 = vset.pattern.permute.xlu0 122
  %1118 = vperm.xlu0 %1117, %v40
  %v1119 = vpop.permute.xlu0 %1118
  %1121 = vset.pattern.permute.xlu0 122
  %1122 = vperm.xlu0 %1121, %v41
  %v1123 = vpop.permute.xlu0 %1122
  %1126 = vset.pattern.permute.xlu0 122
  %1127 = vperm.xlu0 %1126, %v42
  %v1128 = vpop.permute.xlu0 %1127
  %1131 = vset.pattern.permute.xlu0 122
  %1132 = vperm.xlu0 %1131, %v43
  %v1133 = vpop.permute.xlu0 %1132
  %1136 = vset.pattern.permute.xlu0 122
  %1137 = vperm.xlu0 %1136, %v44
  %v1138 = vpop.permute.xlu0 %1137
  %1141 = vset.pattern.permute.xlu0 122
  %1142 = vperm.xlu0 %1141, %v45
  %v1143 = vpop.permute.xlu0 %1142
  %vm1145 = vcmask 261120
  %v1146 = vsel %vm1145, %v16, 0
  %v1148 = vsel %vm1145, %v19, 0
  %v1150 = vsel %vm1145, %v22, 0
  %v1152 = vsel %vm1145, %v25, 0
  %v1155 = vsel %vm1145, %v28, 0
  %v1158 = vsel %vm1145, %v31, 0
  %v1161 = vsel %vm1145, %v34, 0
  %v1164 = vsel %vm1145, %v37, 0
  %1166 = vmatprep.subr.mxu0 0.0
  %1167 = vmatpush1.msra.mxu0 %v1068
  %1168 = vmatprep.subr.mxu0 0.0
  %1169 = vmatpush1.msra.mxu0 %v1066
  %1170 = vmatprep.subr.mxu0 0.0
  %1171 = vmatpush1.msra.mxu0 %v1064
  %1172 = vmatprep.subr.mxu0 0.0
  %1173 = vmatpush1.msra.mxu0 %v1062
  %1174 = vmatprep.subr.mxu0 0.0
  %1175 = vmatpush1.msra.mxu0 %v1060
  %1176 = vmatprep.subr.mxu0 0.0
  %1177 = vmatpush1.msra.mxu0 %v1058
  %1178 = vmatprep.subr.mxu0 0.0
  %1179 = vmatpush1.msra.mxu0 %v1056
  %1180 = vmatprep.subr.mxu0 0.0
  %1181 = vmatpush1.msra.mxu0 %v1054
  %1182 = vmatprep.subr.mxu0 0.0
  %1183 = vmatpush1.msra.mxu0 %v1052
  %1184 = vmatprep.subr.mxu0 0.0
  %1185 = vmatpush1.msra.mxu0 %v1050
  %1186 = vmatprep.subr.mxu0 0.0
  %1187 = vmatpush1.msra.mxu0 %v1048
  %1188 = vmatprep.subr.mxu0 0.0
  %1189 = vmatpush1.msra.mxu0 %v1046
  %1190 = vmatprep.subr.mxu0 0.0
  %1191 = vmatpush1.msra.mxu0 %v1042
  %1192 = vmatprep.subr.mxu0 0.0
  %1193 = vmatpush1.msra.mxu0 %v1037
  %1194 = vmatprep.subr.mxu0 0.0
  %1195 = vmatpush1.msra.mxu0 %v1032
  %1196 = vmatprep.subr.mxu0 0.0
  %1197 = vmatpush1.msra.mxu0 %v1027
  %1198 = vmatprep.subr.mxu0 0.0
  %1199 = vmatpush2.msra.mxu0 %v1100
  %1200 = vmatprep.subr.mxu0 0.0
  %1201 = vmatpush2.msra.mxu0 %v1098
  %1202 = vmatprep.subr.mxu0 0.0
  %1203 = vmatpush2.msra.mxu0 %v1096
  %1204 = vmatprep.subr.mxu0 0.0
  %1205 = vmatpush2.msra.mxu0 %v1094
  %1206 = vmatprep.subr.mxu0 0.0
  %1207 = vmatpush2.msra.mxu0 %v1092
  %1208 = vmatprep.subr.mxu0 0.0
  %1209 = vmatpush2.msra.mxu0 %v1090
  %1210 = vmatprep.subr.mxu0 0.0
  %1211 = vmatpush2.msra.mxu0 %v1088
  %1212 = vmatprep.subr.mxu0 0.0
  %1213 = vmatpush2.msra.mxu0 %v1086
  %1214 = vmatprep.subr.mxu0 0.0
  %1215 = vmatpush2.msra.mxu0 %v1084
  %1216 = vmatprep.subr.mxu0 0.0
  %1217 = vmatpush2.msra.mxu0 %v1082
  %1218 = vmatprep.subr.mxu0 0.0
  %1219 = vmatpush2.msra.mxu0 %v1080
  %1220 = vmatprep.subr.mxu0 0.0
  %1221 = vmatpush2.msra.mxu0 %v1078
  %1222 = vmatprep.subr.mxu0 0.0
  %1223 = vmatpush2.msra.mxu0 %v1076
  %1224 = vmatprep.subr.mxu0 0.0
  %1225 = vmatpush2.msra.mxu0 %v1074
  %1226 = vmatprep.subr.mxu0 0.0
  %1227 = vmatpush2.msra.mxu0 %v1072
  %1228 = vmatprep.subr.mxu0 0.0
  %1229 = vmatpush2.msra.mxu0 %v1070
  %1230 = vmatprep.mubr.f32.mxu0 %v15
  %1231 = vmatmul.mubr.f32.gmra.mxu0 %v14
  %v1232 = vpop.f32.mrf.mxu0
  %v1233 = vadd.f32 %v1111, %v1232
  %v1234 = vpop.f32.mrf.mxu0
  %1235 = vmatprep.mubr.f32.mxu0 %v18
  %1236 = vmatmul.mubr.f32.gmra.mxu0 %v17
  %v1237 = vpop.f32.mrf.mxu0
  %v1238 = vadd.f32 %v1115, %v1237
  %v1239 = vpop.f32.mrf.mxu0
  %1240 = vmatprep.mubr.f32.mxu0 %v21
  %1241 = vmatmul.mubr.f32.gmra.mxu0 %v20
  %v1242 = vpop.f32.mrf.mxu0
  %v1243 = vadd.f32 %v1119, %v1242
  %v1244 = vpop.f32.mrf.mxu0
  %1245 = vmatprep.mubr.f32.mxu0 %v24
  %1246 = vmatmul.mubr.f32.gmra.mxu0 %v23
  %v1247 = vpop.f32.mrf.mxu0
  %v1248 = vadd.f32 %v1123, %v1247
  %v1249 = vpop.f32.mrf.mxu0
  %1250 = vmatprep.mubr.f32.mxu0 %v27
  %1251 = vmatmul.mubr.f32.gmra.mxu0 %v26
  %v1252 = vpop.f32.mrf.mxu0
  %v1253 = vadd.f32 %v1128, %v1252
  %v1254 = vpop.f32.mrf.mxu0
  %1255 = vmatprep.mubr.f32.mxu0 %v30
  %1256 = vmatmul.mubr.f32.gmra.mxu0 %v29
  %v1257 = vpop.f32.mrf.mxu0
  %v1258 = vadd.f32 %v1133, %v1257
  %v1259 = vpop.f32.mrf.mxu0
  %1260 = vmatprep.mubr.f32.mxu0 %v33
  %1261 = vmatmul.mubr.f32.gmra.mxu0 %v32
  %v1262 = vpop.f32.mrf.mxu0
  %v1263 = vadd.f32 %v1138, %v1262
  %v1264 = vpop.f32.mrf.mxu0
  %1265 = vmatprep.mubr.f32.mxu0 %v36
  %1266 = vmatmul.mubr.f32.gmra.mxu0 %v35
  %v1267 = vpop.f32.mrf.mxu0
  %v1268 = vadd.f32 %v1143, %v1267
  %v1269 = vpop.f32.mrf.mxu0
  %1270 = vdwg.mxu0
  %1271 = vmatprep.subr.mxu0 0.0
  %1272 = vmatpush1.msra.mxu0 0.0
  %1273 = vmatprep.subr.mxu0 0.0
  %1274 = vmatpush1.msra.mxu0 0.0
  %1275 = vmatprep.subr.mxu0 0.0
  %1276 = vmatpush1.msra.mxu0 0.0
  %1277 = vmatprep.subr.mxu0 0.0
  %1278 = vmatpush1.msra.mxu0 0.0
  %1279 = vmatprep.subr.mxu0 0.0
  %1280 = vmatpush1.msra.mxu0 0.0
  %1281 = vmatprep.subr.mxu0 0.0
  %1282 = vmatpush1.msra.mxu0 0.0
  %1283 = vmatprep.subr.mxu0 0.0
  %1284 = vmatpush1.msra.mxu0 0.0
  %1285 = vmatprep.subr.mxu0 0.0
  %1286 = vmatpush1.msra.mxu0 0.0
  %1287 = vmatprep.subr.mxu0 0.0
  %1288 = vmatpush1.msra.mxu0 0.0
  %1289 = vmatprep.subr.mxu0 0.0
  %1290 = vmatpush1.msra.mxu0 0.0
  %1291 = vmatprep.subr.mxu0 0.0
  %1292 = vmatpush1.msra.mxu0 0.0
  %1293 = vmatprep.subr.mxu0 0.0
  %1294 = vmatpush1.msra.mxu0 0.0
  %1295 = vmatprep.subr.mxu0 0.0
  %1296 = vmatpush1.msra.mxu0 %v1108
  %1297 = vmatprep.subr.mxu0 0.0
  %1298 = vmatpush1.msra.mxu0 %v1106
  %1299 = vmatprep.subr.mxu0 0.0
  %1300 = vmatpush1.msra.mxu0 %v1104
  %1301 = vmatprep.subr.mxu0 0.0
  %1302 = vmatpush1.msra.mxu0 %v1102
  %1303 = vmatprep.subr.mxu0 0.0
  %1304 = vmatpush2.msra.mxu0 0.0
  %1305 = vmatprep.subr.mxu0 0.0
  %1306 = vmatpush2.msra.mxu0 0.0
  %1307 = vmatprep.subr.mxu0 0.0
  %1308 = vmatpush2.msra.mxu0 0.0
  %1309 = vmatprep.subr.mxu0 0.0
  %1310 = vmatpush2.msra.mxu0 0.0
  %1311 = vmatprep.subr.mxu0 0.0
  %1312 = vmatpush2.msra.mxu0 0.0
  %1313 = vmatprep.subr.mxu0 0.0
  %1314 = vmatpush2.msra.mxu0 0.0
  %1315 = vmatprep.subr.mxu0 0.0
  %1316 = vmatpush2.msra.mxu0 0.0
  %1317 = vmatprep.subr.mxu0 0.0
  %1318 = vmatpush2.msra.mxu0 0.0
  %1319 = vmatprep.subr.mxu0 0.0
  %1320 = vmatpush2.msra.mxu0 0.0
  %1321 = vmatprep.subr.mxu0 0.0
  %1322 = vmatpush2.msra.mxu0 0.0
  %1323 = vmatprep.subr.mxu0 0.0
  %1324 = vmatpush2.msra.mxu0 0.0
  %1325 = vmatprep.subr.mxu0 0.0
  %1326 = vmatpush2.msra.mxu0 0.0
  %1327 = vmatprep.subr.mxu0 0.0
  %1328 = vmatpush2.msra.mxu0 0.0
  %1329 = vmatprep.subr.mxu0 0.0
  %1330 = vmatpush2.msra.mxu0 0.0
  %1331 = vmatprep.subr.mxu0 0.0
  %1332 = vmatpush2.msra.mxu0 0.0
  %1333 = vmatprep.subr.mxu0 0.0
  %1334 = vmatpush2.msra.mxu0 0.0
  %1335 = vmatprep.mubr.f32.mxu0 0.0
  %1336 = vmatmul.mubr.f32.gmra.mxu0 %v1146
  %v1337 = vpop.f32.mrf.mxu0
  %v1338 = vadd.f32 %v1233, %v1337
  %v1339 = vpop.f32.mrf.mxu0
  %1340 = vmatprep.mubr.f32.mxu0 0.0
  %1341 = vmatmul.mubr.f32.gmra.mxu0 %v1148
  %v1342 = vpop.f32.mrf.mxu0
  %v1343 = vadd.f32 %v1238, %v1342
  %v1344 = vpop.f32.mrf.mxu0
  %1345 = vmatprep.mubr.f32.mxu0 0.0
  %1346 = vmatmul.mubr.f32.gmra.mxu0 %v1150
  %v1347 = vpop.f32.mrf.mxu0
  %v1348 = vadd.f32 %v1243, %v1347
  %v1349 = vpop.f32.mrf.mxu0
  %1350 = vmatprep.mubr.f32.mxu0 0.0
  %1351 = vmatmul.mubr.f32.gmra.mxu0 %v1152
  %v1352 = vpop.f32.mrf.mxu0
  %v1353 = vadd.f32 %v1248, %v1352
  %v1354 = vpop.f32.mrf.mxu0
  %1355 = vmatprep.mubr.f32.mxu0 0.0
  %1356 = vmatmul.mubr.f32.gmra.mxu0 %v1155
  %v1357 = vpop.f32.mrf.mxu0
  %v1358 = vadd.f32 %v1253, %v1357
  %v1359 = vpop.f32.mrf.mxu0
  %1360 = vmatprep.mubr.f32.mxu0 0.0
  %1361 = vmatmul.mubr.f32.gmra.mxu0 %v1158
  %v1362 = vpop.f32.mrf.mxu0
  %v1363 = vadd.f32 %v1258, %v1362
  %v1364 = vpop.f32.mrf.mxu0
  %1365 = vmatprep.mubr.f32.mxu0 0.0
  %1366 = vmatmul.mubr.f32.gmra.mxu0 %v1161
  %v1367 = vpop.f32.mrf.mxu0
  %v1368 = vadd.f32 %v1263, %v1367
  %v1369 = vpop.f32.mrf.mxu0
  %1370 = vmatprep.mubr.f32.mxu0 0.0
  %1371 = vmatmul.mubr.f32.gmra.mxu0 %v1164
  %v1372 = vpop.f32.mrf.mxu0
  %v1373 = vadd.f32 %v1268, %v1372
  %v1374 = vpop.f32.mrf.mxu0
  %1375 = vdwg.mxu0
  %v1376 = vmax.f32 %v1338, 0.0
  %v1377 = vmax.f32 %v1343, 0.0
  %v1378 = vmax.f32 %v1348, 0.0
  %v1379 = vmax.f32 %v1353, 0.0
  %v1380 = vmax.f32 %v1358, 0.0
  %v1381 = vmax.f32 %v1363, 0.0
  %v1382 = vmax.f32 %v1368, 0.0
  %v1383 = vmax.f32 %v1373, 0.0
  %v1384 = vlaneseq
  %v1385 = vshrl.u32 %v1384, 7
  %v1386 = vsub.s32 0, %v1385
  %v1387 = vrot.slane %v49, %v1386
  %v1388 = vmul.f32 %v1376, %v1387
  %v1389 = vmul.f32 %v1377, %v1387
  %v1390 = vmul.f32 %v1378, %v1387
  %v1391 = vmul.f32 %v1379, %v1387
  %v1392 = vmul.f32 %v1380, %v1387
  %v1393 = vmul.f32 %v1381, %v1387
  %v1394 = vmul.f32 %v1382, %v1387
  %v1395 = vmul.f32 %v1383, %v1387
  %1396 = vadd.xlane.f32.xlu0 %v1388
  %v1397 = vpop.xlane.xlu0 %1396
  %1398 = vadd.xlane.f32.xlu0 %v1389
  %v1399 = vpop.xlane.xlu0 %1398
  %1400 = vadd.xlane.f32.xlu0 %v1390
  %v1401 = vpop.xlane.xlu0 %1400
  %1402 = vadd.xlane.f32.xlu0 %v1391
  %v1403 = vpop.xlane.xlu0 %1402
  %1404 = vadd.xlane.f32.xlu0 %v1392
  %v1405 = vpop.xlane.xlu0 %1404
  %1406 = vadd.xlane.f32.xlu0 %v1393
  %v1407 = vpop.xlane.xlu0 %1406
  %1408 = vadd.xlane.f32.xlu0 %v1394
  %v1409 = vpop.xlane.xlu0 %1408
  %1410 = vadd.xlane.f32.xlu0 %v1395
  %v1411 = vpop.xlane.xlu0 %1410
  %v1412 = vmul.f32 %v1397, 0.0625
  %v1413 = vmul.f32 %v1399, 0.0625
  %v1414 = vmul.f32 %v1401, 0.0625
  %v1415 = vmul.f32 %v1403, 0.0625
  %v1416 = vmul.f32 %v1405, 0.0625
  %v1417 = vmul.f32 %v1407, 0.0625
  %v1418 = vmul.f32 %v1409, 0.0625
  %v1419 = vmul.f32 %v1411, 0.0625
  %s1420 = scalar_lea.vmem %s0, 24
  %v1421 = vld [vmem:[%s1420] sm:$0xff]
  %v1422 = vld [vmem:[%s1420 + $0x8] sm:$0xff]
  %v1423 = vld [vmem:[%s1420 + $0x10] sm:$0xff]
  %1424 = vrot.lane.b32.xlu0 %v1421, 127
  %v1425 = vpop.permute.xlu0 %1424
  %1426 = vrot.lane.b32.xlu0 %v1422, 127
  %v1427 = vpop.permute.xlu0 %1426
  %1428 = vrot.lane.b32.xlu0 %v1423, 127
  %v1429 = vpop.permute.xlu0 %1428
  %v1430 = vsel %vm310, %v1427, %v1429
  %v1431 = vsel %vm310, %v1425, %v1427
  %v1432 = vsel %vm310, %v1429, %v1425
  %1433 = vrot.lane.b32.xlu0 %v1421, 126
  %v1434 = vpop.permute.xlu0 %1433
  %1435 = vrot.lane.b32.xlu0 %v1422, 126
  %v1436 = vpop.permute.xlu0 %1435
  %1437 = vrot.lane.b32.xlu0 %v1423, 126
  %v1438 = vpop.permute.xlu0 %1437
  %v1439 = vsel %vm320, %v1436, %v1438
  %v1440 = vsel %vm320, %v1434, %v1436
  %v1441 = vsel %vm320, %v1438, %v1434
  %1442 = vrot.lane.b32.xlu0 %v1421, 110
  %v1443 = vpop.permute.xlu0 %1442
  %1444 = vrot.lane.b32.xlu0 %v1422, 110
  %v1445 = vpop.permute.xlu0 %1444
  %1446 = vrot.lane.b32.xlu0 %v1423, 110
  %v1447 = vpop.permute.xlu0 %1446
  %v1448 = vsel %vm330, %v1445, %v1447
  %v1449 = vsel %vm330, %v1443, %v1445
  %v1450 = vsel %vm330, %v1447, %v1443
  %1451 = vrot.lane.b32.xlu0 %v1421, 109
  %v1452 = vpop.permute.xlu0 %1451
  %1453 = vrot.lane.b32.xlu0 %v1422, 109
  %v1454 = vpop.permute.xlu0 %1453
  %1455 = vrot.lane.b32.xlu0 %v1423, 109
  %v1456 = vpop.permute.xlu0 %1455
  %v1457 = vsel %vm340, %v1454, %v1456
  %v1458 = vsel %vm340, %v1452, %v1454
  %v1459 = vsel %vm340, %v1456, %v1452
  %1460 = vrot.lane.b32.xlu0 %v1421, 108
  %v1461 = vpop.permute.xlu0 %1460
  %1462 = vrot.lane.b32.xlu0 %v1422, 108
  %v1463 = vpop.permute.xlu0 %1462
  %1464 = vrot.lane.b32.xlu0 %v1423, 108
  %v1465 = vpop.permute.xlu0 %1464
  %v1466 = vsel %vm350, %v1463, %v1465
  %v1467 = vsel %vm350, %v1461, %v1463
  %v1468 = vsel %vm350, %v1465, %v1461
  %1469 = vrot.lane.b32.xlu0 %v1421, 92
  %v1470 = vpop.permute.xlu0 %1469
  %1471 = vrot.lane.b32.xlu0 %v1422, 92
  %v1472 = vpop.permute.xlu0 %1471
  %1473 = vrot.lane.b32.xlu0 %v1423, 92
  %v1474 = vpop.permute.xlu0 %1473
  %v1475 = vsel %vm360, %v1472, %v1474
  %v1476 = vsel %vm360, %v1470, %v1472
  %v1477 = vsel %vm360, %v1474, %v1470
  %1478 = vrot.lane.b32.xlu0 %v1421, 91
  %v1479 = vpop.permute.xlu0 %1478
  %1480 = vrot.lane.b32.xlu0 %v1422, 91
  %v1481 = vpop.permute.xlu0 %1480
  %1482 = vrot.lane.b32.xlu0 %v1423, 91
  %v1483 = vpop.permute.xlu0 %1482
  %v1484 = vsel %vm370, %v1481, %v1483
  %v1485 = vsel %vm370, %v1479, %v1481
  %v1486 = vsel %vm370, %v1483, %v1479
  %1487 = vrot.lane.b32.xlu0 %v1421, 90
  %v1488 = vpop.permute.xlu0 %1487
  %1489 = vrot.lane.b32.xlu0 %v1422, 90
  %v1490 = vpop.permute.xlu0 %1489
  %1491 = vrot.lane.b32.xlu0 %v1423, 90
  %v1492 = vpop.permute.xlu0 %1491
  %v1493 = vsel %vm380, %v1490, %v1492
  %v1494 = vsel %vm380, %v1488, %v1490
  %v1495 = vsel %vm380, %v1492, %v1488
  %1496 = vmatprep.subr.mxu0 0.0
  %1497 = vmatpush1.msra.mxu0 0.0
  %1498 = vmatprep.subr.mxu0 0.0
  %1499 = vmatpush1.msra.mxu0 0.0
  %1500 = vmatprep.subr.mxu0 0.0
  %1501 = vmatpush1.msra.mxu0 0.0
  %1502 = vmatprep.subr.mxu0 0.0
  %1503 = vmatpush1.msra.mxu0 0.0
  %1504 = vmatprep.subr.mxu0 0.0
  %1505 = vmatpush1.msra.mxu0 0.0
  %1506 = vmatprep.subr.mxu0 0.0
  %1507 = vmatpush1.msra.mxu0 0.0
  %1508 = vmatprep.subr.mxu0 0.0
  %1509 = vmatpush1.msra.mxu0 0.0
  %1510 = vmatprep.subr.mxu0 %v1493
  %1511 = vmatpush1.msra.mxu0 %v1494
  %1512 = vmatprep.subr.mxu0 %v1484
  %1513 = vmatpush1.msra.mxu0 %v1485
  %1514 = vmatprep.subr.mxu0 %v1475
  %1515 = vmatpush1.msra.mxu0 %v1476
  %1516 = vmatprep.subr.mxu0 %v1466
  %1517 = vmatpush1.msra.mxu0 %v1467
  %1518 = vmatprep.subr.mxu0 %v1457
  %1519 = vmatpush1.msra.mxu0 %v1458
  %1520 = vmatprep.subr.mxu0 %v1448
  %1521 = vmatpush1.msra.mxu0 %v1449
  %1522 = vmatprep.subr.mxu0 %v1439
  %1523 = vmatpush1.msra.mxu0 %v1440
  %1524 = vmatprep.subr.mxu0 %v1430
  %1525 = vmatpush1.msra.mxu0 %v1431
  %1526 = vmatprep.subr.mxu0 %v1422
  %1527 = vmatpush1.msra.mxu0 %v1421
  %1528 = vmatprep.subr.mxu0 0.0
  %1529 = vmatpush2.msra.mxu0 0.0
  %1530 = vmatprep.subr.mxu0 0.0
  %1531 = vmatpush2.msra.mxu0 0.0
  %1532 = vmatprep.subr.mxu0 0.0
  %1533 = vmatpush2.msra.mxu0 0.0
  %1534 = vmatprep.subr.mxu0 0.0
  %1535 = vmatpush2.msra.mxu0 0.0
  %1536 = vmatprep.subr.mxu0 0.0
  %1537 = vmatpush2.msra.mxu0 0.0
  %1538 = vmatprep.subr.mxu0 0.0
  %1539 = vmatpush2.msra.mxu0 0.0
  %1540 = vmatprep.subr.mxu0 0.0
  %1541 = vmatpush2.msra.mxu0 0.0
  %1542 = vmatprep.subr.mxu0 0.0
  %1543 = vmatpush2.msra.mxu0 0.0
  %1544 = vmatprep.subr.mxu0 0.0
  %1545 = vmatpush2.msra.mxu0 0.0
  %1546 = vmatprep.subr.mxu0 0.0
  %1547 = vmatpush2.msra.mxu0 0.0
  %1548 = vmatprep.subr.mxu0 0.0
  %1549 = vmatpush2.msra.mxu0 0.0
  %1550 = vmatprep.subr.mxu0 0.0
  %1551 = vmatpush2.msra.mxu0 0.0
  %1552 = vmatprep.subr.mxu0 0.0
  %1553 = vmatpush2.msra.mxu0 0.0
  %1554 = vmatprep.subr.mxu0 0.0
  %1555 = vmatpush2.msra.mxu0 0.0
  %1556 = vmatprep.subr.mxu0 0.0
  %1557 = vmatpush2.msra.mxu0 0.0
  %1558 = vmatprep.subr.mxu0 0.0
  %1559 = vmatpush2.msra.mxu0 0.0
  %1560 = vmatprep.mubr.f32.mxu0 0.0
  %1561 = vmatmul.mubr.f32.gmra.mxu0 %v399
  %v1562 = vpop.f32.mrf.mxu0
  %v1563 = vadd.f32 %v387, %v1562
  %v1564 = vpop.f32.mrf.mxu0
  %v1565 = vadd.f32 %v387, %v1564
  %1566 = vmatprep.mubr.f32.mxu0 0.0
  %1567 = vmatmul.mubr.f32.gmra.mxu0 %v401
  %v1568 = vpop.f32.mrf.mxu0
  %v1569 = vadd.f32 %v392, %v1568
  %v1570 = vpop.f32.mrf.mxu0
  %v1571 = vadd.f32 %v392, %v1570
  %1572 = vdwg.mxu0
  %1573 = vmatprep.subr.mxu0 0.0
  %1574 = vmatpush1.msra.mxu0 0.0
  %1575 = vmatprep.subr.mxu0 0.0
  %1576 = vmatpush1.msra.mxu0 0.0
  %1577 = vmatprep.subr.mxu0 0.0
  %1578 = vmatpush1.msra.mxu0 0.0
  %1579 = vmatprep.subr.mxu0 0.0
  %1580 = vmatpush1.msra.mxu0 0.0
  %1581 = vmatprep.subr.mxu0 0.0
  %1582 = vmatpush1.msra.mxu0 0.0
  %1583 = vmatprep.subr.mxu0 0.0
  %1584 = vmatpush1.msra.mxu0 0.0
  %1585 = vmatprep.subr.mxu0 0.0
  %1586 = vmatpush1.msra.mxu0 0.0
  %1587 = vmatprep.subr.mxu0 0.0
  %1588 = vmatpush1.msra.mxu0 %v1495
  %1589 = vmatprep.subr.mxu0 0.0
  %1590 = vmatpush1.msra.mxu0 %v1486
  %1591 = vmatprep.subr.mxu0 0.0
  %1592 = vmatpush1.msra.mxu0 %v1477
  %1593 = vmatprep.subr.mxu0 0.0
  %1594 = vmatpush1.msra.mxu0 %v1468
  %1595 = vmatprep.subr.mxu0 0.0
  %1596 = vmatpush1.msra.mxu0 %v1459
  %1597 = vmatprep.subr.mxu0 0.0
  %1598 = vmatpush1.msra.mxu0 %v1450
  %1599 = vmatprep.subr.mxu0 0.0
  %1600 = vmatpush1.msra.mxu0 %v1441
  %1601 = vmatprep.subr.mxu0 0.0
  %1602 = vmatpush1.msra.mxu0 %v1432
  %1603 = vmatprep.subr.mxu0 0.0
  %1604 = vmatpush1.msra.mxu0 %v1423
  %1605 = vmatprep.subr.mxu0 0.0
  %1606 = vmatpush2.msra.mxu0 0.0
  %1607 = vmatprep.subr.mxu0 0.0
  %1608 = vmatpush2.msra.mxu0 0.0
  %1609 = vmatprep.subr.mxu0 0.0
  %1610 = vmatpush2.msra.mxu0 0.0
  %1611 = vmatprep.subr.mxu0 0.0
  %1612 = vmatpush2.msra.mxu0 0.0
  %1613 = vmatprep.subr.mxu0 0.0
  %1614 = vmatpush2.msra.mxu0 0.0
  %1615 = vmatprep.subr.mxu0 0.0
  %1616 = vmatpush2.msra.mxu0 0.0
  %1617 = vmatprep.subr.mxu0 0.0
  %1618 = vmatpush2.msra.mxu0 0.0
  %1619 = vmatprep.subr.mxu0 0.0
  %1620 = vmatpush2.msra.mxu0 0.0
  %1621 = vmatprep.subr.mxu0 0.0
  %1622 = vmatpush2.msra.mxu0 0.0
  %1623 = vmatprep.subr.mxu0 0.0
  %1624 = vmatpush2.msra.mxu0 0.0
  %1625 = vmatprep.subr.mxu0 0.0
  %1626 = vmatpush2.msra.mxu0 0.0
  %1627 = vmatprep.subr.mxu0 0.0
  %1628 = vmatpush2.msra.mxu0 0.0
  %1629 = vmatprep.subr.mxu0 0.0
  %1630 = vmatpush2.msra.mxu0 0.0
  %1631 = vmatprep.subr.mxu0 0.0
  %1632 = vmatpush2.msra.mxu0 0.0
  %1633 = vmatprep.subr.mxu0 0.0
  %1634 = vmatpush2.msra.mxu0 0.0
  %1635 = vmatprep.subr.mxu0 0.0
  %1636 = vmatpush2.msra.mxu0 0.0
  %1637 = vmatprep.mubr.f32.mxu0 0.0
  %1638 = vmatmul.mubr.f32.gmra.mxu0 %v399
  %v1639 = vpop.f32.mrf.mxu0
  %v1640 = vadd.f32 %v387, %v1639
  %v1641 = vpop.f32.mrf.mxu0
  %1642 = vmatprep.mubr.f32.mxu0 0.0
  %1643 = vmatmul.mubr.f32.gmra.mxu0 %v401
  %v1644 = vpop.f32.mrf.mxu0
  %v1645 = vadd.f32 %v392, %v1644
  %v1646 = vpop.f32.mrf.mxu0
  %1647 = vdwg.mxu0
  %v1648 = vmax.f32 %v1563, 0.0
  %v1649 = vmax.f32 %v1565, 0.0
  %v1650 = vmax.f32 %v1640, 0.0
  %v1651 = vmax.f32 %v1569, 0.0
  %v1652 = vmax.f32 %v1571, 0.0
  %v1653 = vmax.f32 %v1645, 0.0
  %1654 = vrot.lane.b32.xlu0 %v1648, 110
  %v1655 = vpop.permute.xlu0 %1654
  %1656 = vrot.lane.b32.xlu0 %v1651, 110
  %v1657 = vpop.permute.xlu0 %1656
  %1658 = vrot.lane.b32.xlu0 %v1649, 110
  %v1659 = vpop.permute.xlu0 %1658
  %1660 = vrot.lane.b32.xlu0 %v1652, 110
  %v1661 = vpop.permute.xlu0 %1660
  %1662 = vrot.lane.b32.xlu0 %v1650, 110
  %v1663 = vpop.permute.xlu0 %1662
  %1664 = vrot.lane.b32.xlu0 %v1653, 110
  %v1665 = vpop.permute.xlu0 %1664
  %v1666 = vsel %vm330, %v1659, %v1663
  %v1667 = vsel %vm330, %v1661, %v1665
  %v1668 = vsel %vm330, %v1655, %v1659
  %v1669 = vsel %vm330, %v1657, %v1661
  %v1670 = vsel %vm330, %v1663, %v1655
  %v1671 = vsel %vm330, %v1665, %v1657
  %v1672 = vmax.f32 %v1648, %v1668
  %v1673 = vmax.f32 %v1649, %v1666
  %v1674 = vmax.f32 %v1650, %v1670
  %v1675 = vmax.f32 %v1651, %v1669
  %v1676 = vmax.f32 %v1652, %v1667
  %v1677 = vmax.f32 %v1653, %v1671
  %1678 = vrot.lane.b32.xlu0 %v1672, 127
  %v1679 = vpop.permute.xlu0 %1678
  %1680 = vrot.lane.b32.xlu0 %v1675, 127
  %v1681 = vpop.permute.xlu0 %1680
  %1682 = vrot.lane.b32.xlu0 %v1673, 127
  %v1683 = vpop.permute.xlu0 %1682
  %1684 = vrot.lane.b32.xlu0 %v1676, 127
  %v1685 = vpop.permute.xlu0 %1684
  %1686 = vrot.lane.b32.xlu0 %v1674, 127
  %v1687 = vpop.permute.xlu0 %1686
  %1688 = vrot.lane.b32.xlu0 %v1677, 127
  %v1689 = vpop.permute.xlu0 %1688
  %v1690 = vsel %vm310, %v1683, %v1687
  %v1691 = vsel %vm310, %v1685, %v1689
  %v1692 = vsel %vm310, %v1679, %v1683
  %v1693 = vsel %vm310, %v1681, %v1685
  %v1694 = vsel %vm310, %v1687, %v1679
  %v1695 = vsel %vm310, %v1689, %v1681
  %v1696 = vmax.f32 %v1672, %v1692
  %v1697 = vmax.f32 %v1673, %v1690
  %v1698 = vmax.f32 %v1674, %v1694
  %v1699 = vmax.f32 %v1675, %v1693
  %v1700 = vmax.f32 %v1676, %v1691
  %v1701 = vmax.f32 %v1677, %v1695
  %1702 = vmatprep.subr.mxu0 0.0
  %1703 = vmatpush1.msra.mxu0 %v214
  %1704 = vmatprep.subr.mxu0 0.0
  %1705 = vmatpush1.msra.mxu0 %v213
  %1706 = vmatprep.subr.mxu0 0.0
  %1707 = vmatpush1.msra.mxu0 %v212
  %1708 = vmatprep.subr.mxu0 0.0
  %1709 = vmatpush1.msra.mxu0 %v211
  %1710 = vmatprep.subr.mxu0 0.0
  %1711 = vmatpush1.msra.mxu0 %v210
  %1712 = vmatprep.subr.mxu0 0.0
  %1713 = vmatpush1.msra.mxu0 %v209
  %1714 = vmatprep.subr.mxu0 0.0
  %1715 = vmatpush1.msra.mxu0 %v208
  %1716 = vmatprep.subr.mxu0 0.0
  %1717 = vmatpush1.msra.mxu0 %v207
  %1718 = vmatprep.subr.mxu0 0.0
  %1719 = vmatpush1.msra.mxu0 %v206
  %1720 = vmatprep.subr.mxu0 0.0
  %1721 = vmatpush1.msra.mxu0 %v205
  %1722 = vmatprep.subr.mxu0 0.0
  %1723 = vmatpush1.msra.mxu0 %v204
  %1724 = vmatprep.subr.mxu0 0.0
  %1725 = vmatpush1.msra.mxu0 %v203
  %1726 = vmatprep.subr.mxu0 0.0
  %1727 = vmatpush1.msra.mxu0 %v202
  %1728 = vmatprep.subr.mxu0 0.0
  %1729 = vmatpush1.msra.mxu0 %v201
  %1730 = vmatprep.subr.mxu0 0.0
  %1731 = vmatpush1.msra.mxu0 %v200
  %1732 = vmatprep.subr.mxu0 0.0
  %1733 = vmatpush1.msra.mxu0 %v199
  %1734 = vmatprep.subr.mxu0 0.0
  %1735 = vmatpush2.msra.mxu0 %v230
  %1736 = vmatprep.subr.mxu0 0.0
  %1737 = vmatpush2.msra.mxu0 %v229
  %1738 = vmatprep.subr.mxu0 0.0
  %1739 = vmatpush2.msra.mxu0 %v228
  %1740 = vmatprep.subr.mxu0 0.0
  %1741 = vmatpush2.msra.mxu0 %v227
  %1742 = vmatprep.subr.mxu0 0.0
  %1743 = vmatpush2.msra.mxu0 %v226
  %1744 = vmatprep.subr.mxu0 0.0
  %1745 = vmatpush2.msra.mxu0 %v225
  %1746 = vmatprep.subr.mxu0 0.0
  %1747 = vmatpush2.msra.mxu0 %v224
  %1748 = vmatprep.subr.mxu0 0.0
  %1749 = vmatpush2.msra.mxu0 %v223
  %1750 = vmatprep.subr.mxu0 0.0
  %1751 = vmatpush2.msra.mxu0 %v222
  %1752 = vmatprep.subr.mxu0 0.0
  %1753 = vmatpush2.msra.mxu0 %v221
  %1754 = vmatprep.subr.mxu0 0.0
  %1755 = vmatpush2.msra.mxu0 %v220
  %1756 = vmatprep.subr.mxu0 0.0
  %1757 = vmatpush2.msra.mxu0 %v219
  %1758 = vmatprep.subr.mxu0 0.0
  %1759 = vmatpush2.msra.mxu0 %v218
  %1760 = vmatprep.subr.mxu0 0.0
  %1761 = vmatpush2.msra.mxu0 %v217
  %1762 = vmatprep.subr.mxu0 0.0
  %1763 = vmatpush2.msra.mxu0 %v216
  %1764 = vmatprep.subr.mxu0 0.0
  %1765 = vmatpush2.msra.mxu0 %v215
  %1766 = vmatprep.mubr.f32.mxu0 %v1697
  %1767 = vmatmul.mubr.f32.gmra.mxu0 %v1696
  %v1768 = vpop.f32.mrf.mxu0
  %v1769 = vadd.f32 0.0, %v1768
  %v1770 = vpop.f32.mrf.mxu0
  %1771 = vmatprep.mubr.f32.mxu0 %v1700
  %1772 = vmatmul.mubr.f32.gmra.mxu0 %v1699
  %v1773 = vpop.f32.mrf.mxu0
  %v1774 = vadd.f32 0.0, %v1773
  %v1775 = vpop.f32.mrf.mxu0
  %1776 = vdwg.mxu0
  %1777 = vmatprep.subr.mxu0 0.0
  %1778 = vmatpush1.msra.mxu0 %v246
  %1779 = vmatprep.subr.mxu0 0.0
  %1780 = vmatpush1.msra.mxu0 %v245
  %1781 = vmatprep.subr.mxu0 0.0
  %1782 = vmatpush1.msra.mxu0 %v244
  %1783 = vmatprep.subr.mxu0 0.0
  %1784 = vmatpush1.msra.mxu0 %v243
  %1785 = vmatprep.subr.mxu0 0.0
  %1786 = vmatpush1.msra.mxu0 %v242
  %1787 = vmatprep.subr.mxu0 0.0
  %1788 = vmatpush1.msra.mxu0 %v241
  %1789 = vmatprep.subr.mxu0 0.0
  %1790 = vmatpush1.msra.mxu0 %v240
  %1791 = vmatprep.subr.mxu0 0.0
  %1792 = vmatpush1.msra.mxu0 %v239
  %1793 = vmatprep.subr.mxu0 0.0
  %1794 = vmatpush1.msra.mxu0 %v238
  %1795 = vmatprep.subr.mxu0 0.0
  %1796 = vmatpush1.msra.mxu0 %v237
  %1797 = vmatprep.subr.mxu0 0.0
  %1798 = vmatpush1.msra.mxu0 %v236
  %1799 = vmatprep.subr.mxu0 0.0
  %1800 = vmatpush1.msra.mxu0 %v235
  %1801 = vmatprep.subr.mxu0 0.0
  %1802 = vmatpush1.msra.mxu0 %v234
  %1803 = vmatprep.subr.mxu0 0.0
  %1804 = vmatpush1.msra.mxu0 %v233
  %1805 = vmatprep.subr.mxu0 0.0
  %1806 = vmatpush1.msra.mxu0 %v232
  %1807 = vmatprep.subr.mxu0 0.0
  %1808 = vmatpush1.msra.mxu0 %v231
  %1809 = vmatprep.subr.mxu0 0.0
  %1810 = vmatpush2.msra.mxu0 0.0
  %1811 = vmatprep.subr.mxu0 0.0
  %1812 = vmatpush2.msra.mxu0 0.0
  %1813 = vmatprep.subr.mxu0 0.0
  %1814 = vmatpush2.msra.mxu0 0.0
  %1815 = vmatprep.subr.mxu0 0.0
  %1816 = vmatpush2.msra.mxu0 0.0
  %1817 = vmatprep.subr.mxu0 0.0
  %1818 = vmatpush2.msra.mxu0 0.0
  %1819 = vmatprep.subr.mxu0 0.0
  %1820 = vmatpush2.msra.mxu0 0.0
  %1821 = vmatprep.subr.mxu0 0.0
  %1822 = vmatpush2.msra.mxu0 0.0
  %1823 = vmatprep.subr.mxu0 0.0
  %1824 = vmatpush2.msra.mxu0 0.0
  %1825 = vmatprep.subr.mxu0 0.0
  %1826 = vmatpush2.msra.mxu0 0.0
  %1827 = vmatprep.subr.mxu0 0.0
  %1828 = vmatpush2.msra.mxu0 0.0
  %1829 = vmatprep.subr.mxu0 0.0
  %1830 = vmatpush2.msra.mxu0 0.0
  %1831 = vmatprep.subr.mxu0 0.0
  %1832 = vmatpush2.msra.mxu0 0.0
  %1833 = vmatprep.subr.mxu0 0.0
  %1834 = vmatpush2.msra.mxu0 0.0
  %1835 = vmatprep.subr.mxu0 0.0
  %1836 = vmatpush2.msra.mxu0 0.0
  %1837 = vmatprep.subr.mxu0 0.0
  %1838 = vmatpush2.msra.mxu0 0.0
  %1839 = vmatprep.subr.mxu0 0.0
  %1840 = vmatpush2.msra.mxu0 0.0
  %1841 = vmatprep.mubr.f32.mxu0 0.0
  %1842 = vmatmul.mubr.f32.gmra.mxu0 %v1698
  %v1843 = vpop.f32.mrf.mxu0
  %v1844 = vadd.f32 %v1769, %v1843
  %v1845 = vpop.f32.mrf.mxu0
  %1846 = vmatprep.mubr.f32.mxu0 0.0
  %1847 = vmatmul.mubr.f32.gmra.mxu0 %v1701
  %v1848 = vpop.f32.mrf.mxu0
  %v1849 = vadd.f32 %v1774, %v1848
  %v1850 = vpop.f32.mrf.mxu0
  %1851 = vdwg.mxu0
  %1852 = vrot.lane.b32.xlu0 %v1844, 127
  %v1853 = vpop.permute.xlu0 %1852
  %1854 = vrot.lane.b32.xlu0 %v1849, 127
  %v1855 = vpop.permute.xlu0 %1854
  %1856 = vrot.lane.b32.xlu0 %v1844, 126
  %v1857 = vpop.permute.xlu0 %1856
  %1858 = vrot.lane.b32.xlu0 %v1849, 126
  %v1859 = vpop.permute.xlu0 %1858
  %1860 = vrot.lane.b32.xlu0 %v1844, 118
  %v1861 = vpop.permute.xlu0 %1860
  %1862 = vrot.lane.b32.xlu0 %v1849, 118
  %v1863 = vpop.permute.xlu0 %1862
  %1864 = vrot.lane.b32.xlu0 %v1844, 117
  %v1865 = vpop.permute.xlu0 %1864
  %1866 = vrot.lane.b32.xlu0 %v1849, 117
  %v1867 = vpop.permute.xlu0 %1866
  %1868 = vrot.lane.b32.xlu0 %v1844, 116
  %v1869 = vpop.permute.xlu0 %1868
  %1870 = vrot.lane.b32.xlu0 %v1849, 116
  %v1871 = vpop.permute.xlu0 %1870
  %1872 = vrot.lane.b32.xlu0 %v1844, 108
  %v1873 = vpop.permute.xlu0 %1872
  %1874 = vrot.lane.b32.xlu0 %v1849, 108
  %v1875 = vpop.permute.xlu0 %1874
  %1876 = vrot.lane.b32.xlu0 %v1844, 107
  %v1877 = vpop.permute.xlu0 %1876
  %1878 = vrot.lane.b32.xlu0 %v1849, 107
  %v1879 = vpop.permute.xlu0 %1878
  %1880 = vrot.lane.b32.xlu0 %v1844, 106
  %v1881 = vpop.permute.xlu0 %1880
  %1882 = vrot.lane.b32.xlu0 %v1849, 106
  %v1883 = vpop.permute.xlu0 %1882
  %1884 = vmatprep.subr.mxu0 0.0
  %1885 = vmatpush1.msra.mxu0 %v1879
  %1886 = vmatprep.subr.mxu0 0.0
  %1887 = vmatpush1.msra.mxu0 %v1877
  %1888 = vmatprep.subr.mxu0 0.0
  %1889 = vmatpush1.msra.mxu0 %v1875
  %1890 = vmatprep.subr.mxu0 0.0
  %1891 = vmatpush1.msra.mxu0 %v1873
  %1892 = vmatprep.subr.mxu0 0.0
  %1893 = vmatpush1.msra.mxu0 %v1871
  %1894 = vmatprep.subr.mxu0 0.0
  %1895 = vmatpush1.msra.mxu0 %v1869
  %1896 = vmatprep.subr.mxu0 0.0
  %1897 = vmatpush1.msra.mxu0 %v1867
  %1898 = vmatprep.subr.mxu0 0.0
  %1899 = vmatpush1.msra.mxu0 %v1865
  %1900 = vmatprep.subr.mxu0 0.0
  %1901 = vmatpush1.msra.mxu0 %v1863
  %1902 = vmatprep.subr.mxu0 0.0
  %1903 = vmatpush1.msra.mxu0 %v1861
  %1904 = vmatprep.subr.mxu0 0.0
  %1905 = vmatpush1.msra.mxu0 %v1859
  %1906 = vmatprep.subr.mxu0 0.0
  %1907 = vmatpush1.msra.mxu0 %v1857
  %1908 = vmatprep.subr.mxu0 0.0
  %1909 = vmatpush1.msra.mxu0 %v1855
  %1910 = vmatprep.subr.mxu0 0.0
  %1911 = vmatpush1.msra.mxu0 %v1853
  %1912 = vmatprep.subr.mxu0 0.0
  %1913 = vmatpush1.msra.mxu0 %v1849
  %1914 = vmatprep.subr.mxu0 0.0
  %1915 = vmatpush1.msra.mxu0 %v1844
  %1916 = vmatprep.subr.mxu0 0.0
  %1917 = vmatpush2.msra.mxu0 0.0
  %1918 = vmatprep.subr.mxu0 0.0
  %1919 = vmatpush2.msra.mxu0 0.0
  %1920 = vmatprep.subr.mxu0 0.0
  %1921 = vmatpush2.msra.mxu0 0.0
  %1922 = vmatprep.subr.mxu0 0.0
  %1923 = vmatpush2.msra.mxu0 0.0
  %1924 = vmatprep.subr.mxu0 0.0
  %1925 = vmatpush2.msra.mxu0 0.0
  %1926 = vmatprep.subr.mxu0 0.0
  %1927 = vmatpush2.msra.mxu0 0.0
  %1928 = vmatprep.subr.mxu0 0.0
  %1929 = vmatpush2.msra.mxu0 0.0
  %1930 = vmatprep.subr.mxu0 0.0
  %1931 = vmatpush2.msra.mxu0 0.0
  %1932 = vmatprep.subr.mxu0 0.0
  %1933 = vmatpush2.msra.mxu0 0.0
  %1934 = vmatprep.subr.mxu0 0.0
  %1935 = vmatpush2.msra.mxu0 0.0
  %1936 = vmatprep.subr.mxu0 0.0
  %1937 = vmatpush2.msra.mxu0 0.0
  %1938 = vmatprep.subr.mxu0 0.0
  %1939 = vmatpush2.msra.mxu0 0.0
  %1940 = vmatprep.subr.mxu0 0.0
  %1941 = vmatpush2.msra.mxu0 0.0
  %1942 = vmatprep.subr.mxu0 0.0
  %1943 = vmatpush2.msra.mxu0 0.0
  %1944 = vmatprep.subr.mxu0 0.0
  %1945 = vmatpush2.msra.mxu0 %v1883
  %1946 = vmatprep.subr.mxu0 0.0
  %1947 = vmatpush2.msra.mxu0 %v1881
  %1948 = vmatprep.mubr.f32.mxu0 %v839
  %1949 = vmatmul.mubr.f32.gmra.mxu0 %v830
  %v1950 = vpop.f32.mrf.mxu0
  %v1951 = vadd.f32 %v793, %v1950
  %v1952 = vpop.f32.mrf.mxu0
  %1953 = vmatprep.mubr.f32.mxu0 %v841
  %1954 = vmatmul.mubr.f32.gmra.mxu0 %v831
  %v1955 = vpop.f32.mrf.mxu0
  %v1956 = vadd.f32 %v797, %v1955
  %v1957 = vpop.f32.mrf.mxu0
  %1958 = vmatprep.mubr.f32.mxu0 %v843
  %1959 = vmatmul.mubr.f32.gmra.mxu0 %v832
  %v1960 = vpop.f32.mrf.mxu0
  %v1961 = vadd.f32 %v802, %v1960
  %v1962 = vpop.f32.mrf.mxu0
  %1963 = vmatprep.mubr.f32.mxu0 %v845
  %1964 = vmatmul.mubr.f32.gmra.mxu0 %v833
  %v1965 = vpop.f32.mrf.mxu0
  %v1966 = vadd.f32 %v807, %v1965
  %v1967 = vpop.f32.mrf.mxu0
  %1968 = vdwg.mxu0
  %v1969 = vmax.f32 %v1951, 0.0
  %v1970 = vmax.f32 %v1956, 0.0
  %v1971 = vmax.f32 %v1961, 0.0
  %v1972 = vmax.f32 %v1966, 0.0
  %1973 = vrot.lane.b32.xlu0 %v1969, 118
  %v1974 = vpop.permute.xlu0 %1973
  %1975 = vrot.lane.b32.xlu0 %v1970, 118
  %v1976 = vpop.permute.xlu0 %1975
  %1977 = vrot.lane.b32.xlu0 %v1971, 118
  %v1978 = vpop.permute.xlu0 %1977
  %1979 = vrot.lane.b32.xlu0 %v1972, 118
  %v1980 = vpop.permute.xlu0 %1979
  %v1981 = vmax.f32 %v1969, %v1974
  %v1982 = vmax.f32 %v1970, %v1976
  %v1983 = vmax.f32 %v1971, %v1978
  %v1984 = vmax.f32 %v1972, %v1980
  %1985 = vrot.lane.b32.xlu0 %v1981, 127
  %v1986 = vpop.permute.xlu0 %1985
  %1987 = vrot.lane.b32.xlu0 %v1982, 127
  %v1988 = vpop.permute.xlu0 %1987
  %1989 = vrot.lane.b32.xlu0 %v1983, 127
  %v1990 = vpop.permute.xlu0 %1989
  %1991 = vrot.lane.b32.xlu0 %v1984, 127
  %v1992 = vpop.permute.xlu0 %1991
  %v1993 = vmax.f32 %v1981, %v1986
  %v1994 = vmax.f32 %v1982, %v1988
  %v1995 = vmax.f32 %v1983, %v1990
  %v1996 = vmax.f32 %v1984, %v1992
  %1997 = vmatprep.subr.mxu0 0.0
  %1998 = vmatpush1.msra.mxu0 %v298
  %1999 = vmatprep.subr.mxu0 0.0
  %2000 = vmatpush1.msra.mxu0 %v297
  %2001 = vmatprep.subr.mxu0 0.0
  %2002 = vmatpush1.msra.mxu0 %v296
  %2003 = vmatprep.subr.mxu0 0.0
  %2004 = vmatpush1.msra.mxu0 %v295
  %2005 = vmatprep.subr.mxu0 0.0
  %2006 = vmatpush1.msra.mxu0 %v294
  %2007 = vmatprep.subr.mxu0 0.0
  %2008 = vmatpush1.msra.mxu0 %v293
  %2009 = vmatprep.subr.mxu0 0.0
  %2010 = vmatpush1.msra.mxu0 %v292
  %2011 = vmatprep.subr.mxu0 0.0
  %2012 = vmatpush1.msra.mxu0 %v291
  %2013 = vmatprep.subr.mxu0 0.0
  %2014 = vmatpush1.msra.mxu0 %v290
  %2015 = vmatprep.subr.mxu0 0.0
  %2016 = vmatpush1.msra.mxu0 %v289
  %2017 = vmatprep.subr.mxu0 0.0
  %2018 = vmatpush1.msra.mxu0 %v288
  %2019 = vmatprep.subr.mxu0 0.0
  %2020 = vmatpush1.msra.mxu0 %v287
  %2021 = vmatprep.subr.mxu0 0.0
  %2022 = vmatpush1.msra.mxu0 %v286
  %2023 = vmatprep.subr.mxu0 0.0
  %2024 = vmatpush1.msra.mxu0 %v285
  %2025 = vmatprep.subr.mxu0 0.0
  %2026 = vmatpush1.msra.mxu0 %v284
  %2027 = vmatprep.subr.mxu0 0.0
  %2028 = vmatpush1.msra.mxu0 %v283
  %2029 = vmatprep.subr.mxu0 0.0
  %2030 = vmatpush2.msra.mxu0 0.0
  %2031 = vmatprep.subr.mxu0 0.0
  %2032 = vmatpush2.msra.mxu0 0.0
  %2033 = vmatprep.subr.mxu0 0.0
  %2034 = vmatpush2.msra.mxu0 0.0
  %2035 = vmatprep.subr.mxu0 0.0
  %2036 = vmatpush2.msra.mxu0 0.0
  %2037 = vmatprep.subr.mxu0 0.0
  %2038 = vmatpush2.msra.mxu0 0.0
  %2039 = vmatprep.subr.mxu0 0.0
  %2040 = vmatpush2.msra.mxu0 0.0
  %2041 = vmatprep.subr.mxu0 0.0
  %2042 = vmatpush2.msra.mxu0 0.0
  %2043 = vmatprep.subr.mxu0 0.0
  %2044 = vmatpush2.msra.mxu0 0.0
  %2045 = vmatprep.subr.mxu0 0.0
  %2046 = vmatpush2.msra.mxu0 0.0
  %2047 = vmatprep.subr.mxu0 0.0
  %2048 = vmatpush2.msra.mxu0 0.0
  %2049 = vmatprep.subr.mxu0 0.0
  %2050 = vmatpush2.msra.mxu0 0.0
  %2051 = vmatprep.subr.mxu0 0.0
  %2052 = vmatpush2.msra.mxu0 0.0
  %2053 = vmatprep.subr.mxu0 0.0
  %2054 = vmatpush2.msra.mxu0 0.0
  %2055 = vmatprep.subr.mxu0 0.0
  %2056 = vmatpush2.msra.mxu0 0.0
  %2057 = vmatprep.subr.mxu0 0.0
  %2058 = vmatpush2.msra.mxu0 0.0
  %2059 = vmatprep.subr.mxu0 0.0
  %2060 = vmatpush2.msra.mxu0 0.0
  %2061 = vmatprep.mubr.f32.mxu0 0.0
  %2062 = vmatmul.mubr.f32.gmra.mxu0 %v1993
  %v2063 = vpop.f32.mrf.mxu0
  %v2064 = vadd.f32 0.0, %v2063
  %v2065 = vpop.f32.mrf.mxu0
  %2066 = vmatprep.mubr.f32.mxu0 0.0
  %2067 = vmatmul.mubr.f32.gmra.mxu0 %v1994
  %v2068 = vpop.f32.mrf.mxu0
  %v2069 = vadd.f32 0.0, %v2068
  %v2070 = vpop.f32.mrf.mxu0
  %2071 = vmatprep.mubr.f32.mxu0 0.0
  %2072 = vmatmul.mubr.f32.gmra.mxu0 %v1995
  %v2073 = vpop.f32.mrf.mxu0
  %v2074 = vadd.f32 0.0, %v2073
  %v2075 = vpop.f32.mrf.mxu0
  %2076 = vmatprep.mubr.f32.mxu0 0.0
  %2077 = vmatmul.mubr.f32.gmra.mxu0 %v1996
  %v2078 = vpop.f32.mrf.mxu0
  %v2079 = vadd.f32 0.0, %v2078
  %v2080 = vpop.f32.mrf.mxu0
  %2081 = vdwg.mxu0
  %2082 = vrot.lane.b32.xlu0 %v2064, 127
  %v2083 = vpop.permute.xlu0 %2082
  %2084 = vrot.lane.b32.xlu0 %v2069, 127
  %v2085 = vpop.permute.xlu0 %2084
  %2086 = vrot.lane.b32.xlu0 %v2074, 127
  %v2087 = vpop.permute.xlu0 %2086
  %2088 = vrot.lane.b32.xlu0 %v2079, 127
  %v2089 = vpop.permute.xlu0 %2088
  %2090 = vrot.lane.b32.xlu0 %v2064, 126
  %v2091 = vpop.permute.xlu0 %2090
  %2092 = vrot.lane.b32.xlu0 %v2069, 126
  %v2093 = vpop.permute.xlu0 %2092
  %2094 = vrot.lane.b32.xlu0 %v2074, 126
  %v2095 = vpop.permute.xlu0 %2094
  %2096 = vrot.lane.b32.xlu0 %v2079, 126
  %v2097 = vpop.permute.xlu0 %2096
  %2098 = vrot.lane.b32.xlu0 %v2064, 122
  %v2099 = vpop.permute.xlu0 %2098
  %2100 = vrot.lane.b32.xlu0 %v2069, 122
  %v2101 = vpop.permute.xlu0 %2100
  %2102 = vrot.lane.b32.xlu0 %v2074, 122
  %v2103 = vpop.permute.xlu0 %2102
  %2104 = vrot.lane.b32.xlu0 %v2079, 122
  %v2105 = vpop.permute.xlu0 %2104
  %2106 = vrot.lane.b32.xlu0 %v2064, 121
  %v2107 = vpop.permute.xlu0 %2106
  %2108 = vrot.lane.b32.xlu0 %v2069, 121
  %v2109 = vpop.permute.xlu0 %2108
  %2110 = vrot.lane.b32.xlu0 %v2074, 121
  %v2111 = vpop.permute.xlu0 %2110
  %2112 = vrot.lane.b32.xlu0 %v2079, 121
  %v2113 = vpop.permute.xlu0 %2112
  %2114 = vrot.lane.b32.xlu0 %v2064, 120
  %v2115 = vpop.permute.xlu0 %2114
  %2116 = vrot.lane.b32.xlu0 %v2069, 120
  %v2117 = vpop.permute.xlu0 %2116
  %2118 = vrot.lane.b32.xlu0 %v2074, 120
  %v2119 = vpop.permute.xlu0 %2118
  %2120 = vrot.lane.b32.xlu0 %v2079, 120
  %v2121 = vpop.permute.xlu0 %2120
  %2122 = vrot.lane.b32.xlu0 %v2064, 116
  %v2123 = vpop.permute.xlu0 %2122
  %2124 = vrot.lane.b32.xlu0 %v2069, 116
  %v2125 = vpop.permute.xlu0 %2124
  %2126 = vrot.lane.b32.xlu0 %v2074, 116
  %v2127 = vpop.permute.xlu0 %2126
  %2128 = vrot.lane.b32.xlu0 %v2079, 116
  %v2129 = vpop.permute.xlu0 %2128
  %2130 = vrot.lane.b32.xlu0 %v2064, 115
  %v2131 = vpop.permute.xlu0 %2130
  %2132 = vrot.lane.b32.xlu0 %v2069, 115
  %v2133 = vpop.permute.xlu0 %2132
  %2134 = vrot.lane.b32.xlu0 %v2074, 115
  %v2135 = vpop.permute.xlu0 %2134
  %2136 = vrot.lane.b32.xlu0 %v2079, 115
  %v2137 = vpop.permute.xlu0 %2136
  %2138 = vrot.lane.b32.xlu0 %v2064, 114
  %v2139 = vpop.permute.xlu0 %2138
  %2140 = vrot.lane.b32.xlu0 %v2069, 114
  %v2141 = vpop.permute.xlu0 %2140
  %2142 = vrot.lane.b32.xlu0 %v2074, 114
  %v2143 = vpop.permute.xlu0 %2142
  %2144 = vrot.lane.b32.xlu0 %v2079, 114
  %v2145 = vpop.permute.xlu0 %2144
  %2146 = vmatprep.subr.mxu0 0.0
  %2147 = vmatpush1.msra.mxu0 %v2105
  %2148 = vmatprep.subr.mxu0 0.0
  %2149 = vmatpush1.msra.mxu0 %v2103
  %2150 = vmatprep.subr.mxu0 0.0
  %2151 = vmatpush1.msra.mxu0 %v2101
  %2152 = vmatprep.subr.mxu0 0.0
  %2153 = vmatpush1.msra.mxu0 %v2099
  %2154 = vmatprep.subr.mxu0 0.0
  %2155 = vmatpush1.msra.mxu0 %v2097
  %2156 = vmatprep.subr.mxu0 0.0
  %2157 = vmatpush1.msra.mxu0 %v2095
  %2158 = vmatprep.subr.mxu0 0.0
  %2159 = vmatpush1.msra.mxu0 %v2093
  %2160 = vmatprep.subr.mxu0 0.0
  %2161 = vmatpush1.msra.mxu0 %v2091
  %2162 = vmatprep.subr.mxu0 0.0
  %2163 = vmatpush1.msra.mxu0 %v2089
  %2164 = vmatprep.subr.mxu0 0.0
  %2165 = vmatpush1.msra.mxu0 %v2087
  %2166 = vmatprep.subr.mxu0 0.0
  %2167 = vmatpush1.msra.mxu0 %v2085
  %2168 = vmatprep.subr.mxu0 0.0
  %2169 = vmatpush1.msra.mxu0 %v2083
  %2170 = vmatprep.subr.mxu0 0.0
  %2171 = vmatpush1.msra.mxu0 %v2079
  %2172 = vmatprep.subr.mxu0 0.0
  %2173 = vmatpush1.msra.mxu0 %v2074
  %2174 = vmatprep.subr.mxu0 0.0
  %2175 = vmatpush1.msra.mxu0 %v2069
  %2176 = vmatprep.subr.mxu0 0.0
  %2177 = vmatpush1.msra.mxu0 %v2064
  %2178 = vmatprep.subr.mxu0 0.0
  %2179 = vmatpush2.msra.mxu0 %v2137
  %2180 = vmatprep.subr.mxu0 0.0
  %2181 = vmatpush2.msra.mxu0 %v2135
  %2182 = vmatprep.subr.mxu0 0.0
  %2183 = vmatpush2.msra.mxu0 %v2133
  %2184 = vmatprep.subr.mxu0 0.0
  %2185 = vmatpush2.msra.mxu0 %v2131
  %2186 = vmatprep.subr.mxu0 0.0
  %2187 = vmatpush2.msra.mxu0 %v2129
  %2188 = vmatprep.subr.mxu0 0.0
  %2189 = vmatpush2.msra.mxu0 %v2127
  %2190 = vmatprep.subr.mxu0 0.0
  %2191 = vmatpush2.msra.mxu0 %v2125
  %2192 = vmatprep.subr.mxu0 0.0
  %2193 = vmatpush2.msra.mxu0 %v2123
  %2194 = vmatprep.subr.mxu0 0.0
  %2195 = vmatpush2.msra.mxu0 %v2121
  %2196 = vmatprep.subr.mxu0 0.0
  %2197 = vmatpush2.msra.mxu0 %v2119
  %2198 = vmatprep.subr.mxu0 0.0
  %2199 = vmatpush2.msra.mxu0 %v2117
  %2200 = vmatprep.subr.mxu0 0.0
  %2201 = vmatpush2.msra.mxu0 %v2115
  %2202 = vmatprep.subr.mxu0 0.0
  %2203 = vmatpush2.msra.mxu0 %v2113
  %2204 = vmatprep.subr.mxu0 0.0
  %2205 = vmatpush2.msra.mxu0 %v2111
  %2206 = vmatprep.subr.mxu0 0.0
  %2207 = vmatpush2.msra.mxu0 %v2109
  %2208 = vmatprep.subr.mxu0 0.0
  %2209 = vmatpush2.msra.mxu0 %v2107
  %2210 = vmatprep.mubr.f32.mxu0 %v15
  %2211 = vmatmul.mubr.f32.gmra.mxu0 %v14
  %v2212 = vpop.f32.mrf.mxu0
  %v2213 = vadd.f32 %v1111, %v2212
  %v2214 = vpop.f32.mrf.mxu0
  %2215 = vmatprep.mubr.f32.mxu0 %v18
  %2216 = vmatmul.mubr.f32.gmra.mxu0 %v17
  %v2217 = vpop.f32.mrf.mxu0
  %v2218 = vadd.f32 %v1115, %v2217
  %v2219 = vpop.f32.mrf.mxu0
  %2220 = vmatprep.mubr.f32.mxu0 %v21
  %2221 = vmatmul.mubr.f32.gmra.mxu0 %v20
  %v2222 = vpop.f32.mrf.mxu0
  %v2223 = vadd.f32 %v1119, %v2222
  %v2224 = vpop.f32.mrf.mxu0
  %2225 = vmatprep.mubr.f32.mxu0 %v24
  %2226 = vmatmul.mubr.f32.gmra.mxu0 %v23
  %v2227 = vpop.f32.mrf.mxu0
  %v2228 = vadd.f32 %v1123, %v2227
  %v2229 = vpop.f32.mrf.mxu0
  %2230 = vmatprep.mubr.f32.mxu0 %v27
  %2231 = vmatmul.mubr.f32.gmra.mxu0 %v26
  %v2232 = vpop.f32.mrf.mxu0
  %v2233 = vadd.f32 %v1128, %v2232
  %v2234 = vpop.f32.mrf.mxu0
  %2235 = vmatprep.mubr.f32.mxu0 %v30
  %2236 = vmatmul.mubr.f32.gmra.mxu0 %v29
  %v2237 = vpop.f32.mrf.mxu0
  %v2238 = vadd.f32 %v1133, %v2237
  %v2239 = vpop.f32.mrf.mxu0
  %2240 = vmatprep.mubr.f32.mxu0 %v33
  %2241 = vmatmul.mubr.f32.gmra.mxu0 %v32
  %v2242 = vpop.f32.mrf.mxu0
  %v2243 = vadd.f32 %v1138, %v2242
  %v2244 = vpop.f32.mrf.mxu0
  %2245 = vmatprep.mubr.f32.mxu0 %v36
  %2246 = vmatmul.mubr.f32.gmra.mxu0 %v35
  %v2247 = vpop.f32.mrf.mxu0
  %v2248 = vadd.f32 %v1143, %v2247
  %v2249 = vpop.f32.mrf.mxu0
  %2250 = vdwg.mxu0
  %2251 = vmatprep.subr.mxu0 0.0
  %2252 = vmatpush1.msra.mxu0 0.0
  %2253 = vmatprep.subr.mxu0 0.0
  %2254 = vmatpush1.msra.mxu0 0.0
  %2255 = vmatprep.subr.mxu0 0.0
  %2256 = vmatpush1.msra.mxu0 0.0
  %2257 = vmatprep.subr.mxu0 0.0
  %2258 = vmatpush1.msra.mxu0 0.0
  %2259 = vmatprep.subr.mxu0 0.0
  %2260 = vmatpush1.msra.mxu0 0.0
  %2261 = vmatprep.subr.mxu0 0.0
  %2262 = vmatpush1.msra.mxu0 0.0
  %2263 = vmatprep.subr.mxu0 0.0
  %2264 = vmatpush1.msra.mxu0 0.0
  %2265 = vmatprep.subr.mxu0 0.0
  %2266 = vmatpush1.msra.mxu0 0.0
  %2267 = vmatprep.subr.mxu0 0.0
  %2268 = vmatpush1.msra.mxu0 0.0
  %2269 = vmatprep.subr.mxu0 0.0
  %2270 = vmatpush1.msra.mxu0 0.0
  %2271 = vmatprep.subr.mxu0 0.0
  %2272 = vmatpush1.msra.mxu0 0.0
  %2273 = vmatprep.subr.mxu0 0.0
  %2274 = vmatpush1.msra.mxu0 0.0
  %2275 = vmatprep.subr.mxu0 0.0
  %2276 = vmatpush1.msra.mxu0 %v2145
  %2277 = vmatprep.subr.mxu0 0.0
  %2278 = vmatpush1.msra.mxu0 %v2143
  %2279 = vmatprep.subr.mxu0 0.0
  %2280 = vmatpush1.msra.mxu0 %v2141
  %2281 = vmatprep.subr.mxu0 0.0
  %2282 = vmatpush1.msra.mxu0 %v2139
  %2283 = vmatprep.subr.mxu0 0.0
  %2284 = vmatpush2.msra.mxu0 0.0
  %2285 = vmatprep.subr.mxu0 0.0
  %2286 = vmatpush2.msra.mxu0 0.0
  %2287 = vmatprep.subr.mxu0 0.0
  %2288 = vmatpush2.msra.mxu0 0.0
  %2289 = vmatprep.subr.mxu0 0.0
  %2290 = vmatpush2.msra.mxu0 0.0
  %2291 = vmatprep.subr.mxu0 0.0
  %2292 = vmatpush2.msra.mxu0 0.0
  %2293 = vmatprep.subr.mxu0 0.0
  %2294 = vmatpush2.msra.mxu0 0.0
  %2295 = vmatprep.subr.mxu0 0.0
  %2296 = vmatpush2.msra.mxu0 0.0
  %2297 = vmatprep.subr.mxu0 0.0
  %2298 = vmatpush2.msra.mxu0 0.0
  %2299 = vmatprep.subr.mxu0 0.0
  %2300 = vmatpush2.msra.mxu0 0.0
  %2301 = vmatprep.subr.mxu0 0.0
  %2302 = vmatpush2.msra.mxu0 0.0
  %2303 = vmatprep.subr.mxu0 0.0
  %2304 = vmatpush2.msra.mxu0 0.0
  %2305 = vmatprep.subr.mxu0 0.0
  %2306 = vmatpush2.msra.mxu0 0.0
  %2307 = vmatprep.subr.mxu0 0.0
  %2308 = vmatpush2.msra.mxu0 0.0
  %2309 = vmatprep.subr.mxu0 0.0
  %2310 = vmatpush2.msra.mxu0 0.0
  %2311 = vmatprep.subr.mxu0 0.0
  %2312 = vmatpush2.msra.mxu0 0.0
  %2313 = vmatprep.subr.mxu0 0.0
  %2314 = vmatpush2.msra.mxu0 0.0
  %2315 = vmatprep.mubr.f32.mxu0 0.0
  %2316 = vmatmul.mubr.f32.gmra.mxu0 %v1146
  %v2317 = vpop.f32.mrf.mxu0
  %v2318 = vadd.f32 %v2213, %v2317
  %v2319 = vpop.f32.mrf.mxu0
  %2320 = vmatprep.mubr.f32.mxu0 0.0
  %2321 = vmatmul.mubr.f32.gmra.mxu0 %v1148
  %v2322 = vpop.f32.mrf.mxu0
  %v2323 = vadd.f32 %v2218, %v2322
  %v2324 = vpop.f32.mrf.mxu0
  %2325 = vmatprep.mubr.f32.mxu0 0.0
  %2326 = vmatmul.mubr.f32.gmra.mxu0 %v1150
  %v2327 = vpop.f32.mrf.mxu0
  %v2328 = vadd.f32 %v2223, %v2327
  %v2329 = vpop.f32.mrf.mxu0
  %2330 = vmatprep.mubr.f32.mxu0 0.0
  %2331 = vmatmul.mubr.f32.gmra.mxu0 %v1152
  %v2332 = vpop.f32.mrf.mxu0
  %v2333 = vadd.f32 %v2228, %v2332
  %v2334 = vpop.f32.mrf.mxu0
  %2335 = vmatprep.mubr.f32.mxu0 0.0
  %2336 = vmatmul.mubr.f32.gmra.mxu0 %v1155
  %v2337 = vpop.f32.mrf.mxu0
  %v2338 = vadd.f32 %v2233, %v2337
  %v2339 = vpop.f32.mrf.mxu0
  %2340 = vmatprep.mubr.f32.mxu0 0.0
  %2341 = vmatmul.mubr.f32.gmra.mxu0 %v1158
  %v2342 = vpop.f32.mrf.mxu0
  %v2343 = vadd.f32 %v2238, %v2342
  %v2344 = vpop.f32.mrf.mxu0
  %2345 = vmatprep.mubr.f32.mxu0 0.0
  %2346 = vmatmul.mubr.f32.gmra.mxu0 %v1161
  %v2347 = vpop.f32.mrf.mxu0
  %v2348 = vadd.f32 %v2243, %v2347
  %v2349 = vpop.f32.mrf.mxu0
  %2350 = vmatprep.mubr.f32.mxu0 0.0
  %2351 = vmatmul.mubr.f32.gmra.mxu0 %v1164
  %v2352 = vpop.f32.mrf.mxu0
  %v2353 = vadd.f32 %v2248, %v2352
  %v2354 = vpop.f32.mrf.mxu0
  %2355 = vdwg.mxu0
  %v2356 = vmax.f32 %v2318, 0.0
  %v2357 = vmax.f32 %v2323, 0.0
  %v2358 = vmax.f32 %v2328, 0.0
  %v2359 = vmax.f32 %v2333, 0.0
  %v2360 = vmax.f32 %v2338, 0.0
  %v2361 = vmax.f32 %v2343, 0.0
  %v2362 = vmax.f32 %v2348, 0.0
  %v2363 = vmax.f32 %v2353, 0.0
  %v2364 = vmul.f32 %v2356, %v1387
  %v2365 = vmul.f32 %v2357, %v1387
  %v2366 = vmul.f32 %v2358, %v1387
  %v2367 = vmul.f32 %v2359, %v1387
  %v2368 = vmul.f32 %v2360, %v1387
  %v2369 = vmul.f32 %v2361, %v1387
  %v2370 = vmul.f32 %v2362, %v1387
  %v2371 = vmul.f32 %v2363, %v1387
  %2372 = vadd.xlane.f32.xlu0 %v2364
  %v2373 = vpop.xlane.xlu0 %2372
  %2374 = vadd.xlane.f32.xlu0 %v2365
  %v2375 = vpop.xlane.xlu0 %2374
  %2376 = vadd.xlane.f32.xlu0 %v2366
  %v2377 = vpop.xlane.xlu0 %2376
  %2378 = vadd.xlane.f32.xlu0 %v2367
  %v2379 = vpop.xlane.xlu0 %2378
  %2380 = vadd.xlane.f32.xlu0 %v2368
  %v2381 = vpop.xlane.xlu0 %2380
  %2382 = vadd.xlane.f32.xlu0 %v2369
  %v2383 = vpop.xlane.xlu0 %2382
  %2384 = vadd.xlane.f32.xlu0 %v2370
  %v2385 = vpop.xlane.xlu0 %2384
  %2386 = vadd.xlane.f32.xlu0 %v2371
  %v2387 = vpop.xlane.xlu0 %2386
  %v2388 = vmul.f32 %v2373, 0.0625
  %v2389 = vmul.f32 %v2375, 0.0625
  %v2390 = vmul.f32 %v2377, 0.0625
  %v2391 = vmul.f32 %v2379, 0.0625
  %v2392 = vmul.f32 %v2381, 0.0625
  %v2393 = vmul.f32 %v2383, 0.0625
  %v2394 = vmul.f32 %v2385, 0.0625
  %v2395 = vmul.f32 %v2387, 0.0625
  %vm2396 = vcmask 7168
  %v2397 = vsel %vm2396, %v1412, %v2388
  %v2398 = vsel %vm2396, %v1413, %v2389
  %v2399 = vsel %vm2396, %v1414, %v2390
  %v2400 = vsel %vm2396, %v1415, %v2391
  %v2401 = vsel %vm2396, %v1416, %v2392
  %v2402 = vsel %vm2396, %v1417, %v2393
  %v2403 = vsel %vm2396, %v1418, %v2394
  %v2404 = vsel %vm2396, %v1419, %v2395
  %vm2405 = vcmask 15360
  %2406 = vst.msk [vmem:[%s3] sm:$0xff] %vm2405, %v2397
  %2407 = vst.msk [vmem:[%s3 + $0x8] sm:$0xff] %vm2405, %v2398
  %2408 = vst.msk [vmem:[%s3 + $0x10] sm:$0xff] %vm2405, %v2399
  %2409 = vst.msk [vmem:[%s3 + $0x18] sm:$0xff] %vm2405, %v2400
  %2410 = vst.msk [vmem:[%s3 + $0x20] sm:$0xff] %vm2405, %v2401
  %2411 = vst.msk [vmem:[%s3 + $0x28] sm:$0xff] %vm2405, %v2402
  %2412 = vst.msk [vmem:[%s3 + $0x30] sm:$0xff] %vm2405, %v2403
  %2413 = vst.msk [vmem:[%s3 + $0x38] sm:$0xff] %vm2405, %v2404
  // Predicated region
  $region14: #{cnn_encoder_forward.1} parent=0 // pred_check
    _
  $region15: #{cnn_encoder_forward.1} parent=0 // pred_check_branch
    %2415 = sbr.rel (0) target = $region17
  $region16: #{cnn_encoder_forward.1} parent=0 // pred_region
    _
  $region17: #{cnn_encoder_forward.1} parent=0 // pred_fallthru
    _
  // Predicated region
  $region18: #{cnn_encoder_forward.1} parent=0 // pred_check
    _
  $region19: #{cnn_encoder_forward.1} parent=0 // pred_check_branch
    %2417 = sbr.rel (0) target = $region21
  $region20: #{cnn_encoder_forward.1} parent=0 // pred_region
    _
  $region21: #{cnn_encoder_forward.1} parent=0 // pred_fallthru
    _

</llo_original>
